<compile_context>
chip_gen: v7x
topology: tpu7x:2x2x1
jax: 0.10.0
libtpu: 0.0.40
codegen_flags: <defaults>
</compile_context>

<pallas_src>
from functools import partial

import jax
import jax.numpy as jnp
import numpy as np
from jax import lax
from jax.experimental import pallas as pl
from jax.experimental.pallas import tpu as pltpu

KH = KW = 5   # Conv2d kernel_size=5
POOL = 2      # F.max_pool2d(., 2)
LANE = 128
VMEM_LIMIT = 32 * 1024 * 1024   # fits v7x scoped default; tiles below use only a few MiB


def _pad_to(x, axis, mult):
    """Zero-pad `axis` of x up to the next multiple of `mult` (no-op if aligned)."""
    pad = (-x.shape[axis]) % mult
    if pad == 0:
        return x
    widths = [(0, 0)] * x.ndim
    widths[axis] = (0, pad)
    return jnp.pad(x, widths)


# ----------------------------------------------------------------------------
# Kernel 1: conv1 (im2col matmul, 4 pool offsets) + 2x2 maxpool + bias + relu.
# p_ref block: (4, TM, Kp) bf16; w: (Kp, Cp) bf16; b: (1, Cp) f32; out: (TM, Cp) f32.
# ----------------------------------------------------------------------------
def _conv_pool_relu_kernel(p_ref, w_ref, b_ref, o_ref):
    w = w_ref[...]
    a0 = jnp.dot(p_ref[0], w, preferred_element_type=jnp.float32)
    a1 = jnp.dot(p_ref[1], w, preferred_element_type=jnp.float32)
    a2 = jnp.dot(p_ref[2], w, preferred_element_type=jnp.float32)
    a3 = jnp.dot(p_ref[3], w, preferred_element_type=jnp.float32)
    pooled = jnp.maximum(jnp.maximum(a0, a1), jnp.maximum(a2, a3))
    o_ref[...] = jnp.maximum(pooled + b_ref[...], 0.0)   # bias once after max, then relu


def conv_pool_relu(patches, w, b, *, tm):
    # patches: (4, M, Kp) bf16   w: (Kp, Cp) bf16   b: (1, Cp) f32   ->  (M, Cp) f32
    _, M, Kp = patches.shape
    Cp = w.shape[1]
    tm_eff = M if M <= tm else tm             # tm must be a multiple of 16 (bf16 sublanes)
    grid = (pl.cdiv(M, tm_eff),)
    return pl.pallas_call(
        _conv_pool_relu_kernel,
        out_shape=jax.ShapeDtypeStruct((M, Cp), jnp.float32),
        grid_spec=pltpu.PrefetchScalarGridSpec(
            num_scalar_prefetch=0,
            grid=grid,
            in_specs=[
                pl.BlockSpec((4, tm_eff, Kp), lambda i: (0, i, 0)),
                pl.BlockSpec((Kp, Cp), lambda i: (0, 0)),    # weight stays VMEM-resident
                pl.BlockSpec((1, Cp), lambda i: (0, 0)),     # bias stays VMEM-resident
            ],
            out_specs=pl.BlockSpec((tm_eff, Cp), lambda i: (i, 0)),
        ),
        compiler_params=pltpu.CompilerParams(
            dimension_semantics=("parallel",),               # megacore sharding on v7x
            vmem_limit_bytes=VMEM_LIMIT),
    )(patches, w, b)


# ----------------------------------------------------------------------------
# Kernel 2 (fused tail): conv2 matmul + 2x2 maxpool + bias + relu
#                        + fc1 + relu + fc2 + log_softmax (over 128 padded classes).
# Dropout2d / F.dropout are identity (inference semantics).
# ----------------------------------------------------------------------------
def _conv2_mlp_kernel(p_ref, wc_ref, bc_ref, w1_ref, b1_ref, w2_ref, b2_ref, o_ref):
    wc = wc_ref[...]
    a0 = jnp.dot(p_ref[0], wc, preferred_element_type=jnp.float32)
    a1 = jnp.dot(p_ref[1], wc, preferred_element_type=jnp.float32)
    a2 = jnp.dot(p_ref[2], wc, preferred_element_type=jnp.float32)
    a3 = jnp.dot(p_ref[3], wc, preferred_element_type=jnp.float32)
    pooled = jnp.maximum(jnp.maximum(a0, a1), jnp.maximum(a2, a3))
    # (TN, 128): real conv2 channels in cols [0,64); padded cols are exactly zero.
    h2 = jnp.maximum(pooled + bc_ref[...], 0.0)
    # TODO(synk): Dropout2d / F.dropout are identity here (eval-mode semantics).
    h = jnp.dot(h2.astype(jnp.bfloat16), w1_ref[...],
                preferred_element_type=jnp.float32) + b1_ref[...]
    h = jnp.maximum(h, 0.0)
    logits = jnp.dot(h.astype(jnp.bfloat16), w2_ref[...],
                     preferred_element_type=jnp.float32) + b2_ref[...]
    # Padded classes have bias -1e30 -> contribute 0 to logsumexp; real columns are exact.
    z = logits - jnp.max(logits, axis=-1, keepdims=True)
    lse = jnp.log(jnp.sum(jnp.exp(z), axis=-1, keepdims=True))
    o_ref[...] = z - lse


def conv2_mlp_head(p2, wc, bc, w1, b1, w2, b2, *, tn):
    # p2: (4, R, K2) bf16  wc: (K2, Cp)  w1: (Cp, H)  w2: (H, Cout=128)  -> (R, 128) f32
    _, R, K2 = p2.shape
    Cp = wc.shape[1]
    H = w1.shape[1]
    Cout = w2.shape[1]
    tn_eff = R if R <= tn else tn
    grid = (pl.cdiv(R, tn_eff),)
    return pl.pallas_call(
        _conv2_mlp_kernel,
        out_shape=jax.ShapeDtypeStruct((R, Cout), jnp.float32),
        grid_spec=pltpu.PrefetchScalarGridSpec(
            num_scalar_prefetch=0,
            grid=grid,
            in_specs=[
                pl.BlockSpec((4, tn_eff, K2), lambda i: (0, i, 0)),
                pl.BlockSpec((K2, Cp), lambda i: (0, 0)),
                pl.BlockSpec((1, Cp), lambda i: (0, 0)),
                pl.BlockSpec((Cp, H), lambda i: (0, 0)),
                pl.BlockSpec((1, H), lambda i: (0, 0)),
                pl.BlockSpec((H, Cout), lambda i: (0, 0)),
                pl.BlockSpec((1, Cout), lambda i: (0, 0)),
            ],
            out_specs=pl.BlockSpec((tn_eff, Cout), lambda i: (i, 0)),
        ),
        compiler_params=pltpu.CompilerParams(
            dimension_semantics=("parallel",),
            vmem_limit_bytes=VMEM_LIMIT),
    )(p2, wc, bc, w1, b1, w2, b2)


# ----------------------------------------------------------------------------
# JAX glue: pooled im2col (layout transform only, no compute).
# ----------------------------------------------------------------------------
def pooled_im2col(x_nhwc, kh, kw, pool):
    """Returns (pool*pool, N*Hp*Wp, kh*kw*C); slab [di*pool+dj] holds the patches
    feeding conv output pixel (pool*i+di, pool*j+dj)."""
    N, H, W, C = x_nhwc.shape
    Ho, Wo = H - kh + 1, W - kw + 1
    Hp, Wp = Ho // pool, Wo // pool
    offs = []
    for di in range(pool):
        for dj in range(pool):
            cols = []
            for ih in range(kh):
                for iw in range(kw):
                    sl = x_nhwc[:, di + ih: di + ih + pool * Hp: pool,
                                   dj + iw: dj + iw + pool * Wp: pool, :]
                    cols.append(sl)                       # (N, Hp, Wp, C)
            patch = jnp.stack(cols, axis=-2)              # (N, Hp, Wp, kh*kw, C)
            offs.append(patch.reshape(N * Hp * Wp, kh * kw * C))
    return jnp.stack(offs, axis=0), (Hp, Wp)


# ----------------------------------------------------------------------------
# Full forward pass (matches FlowerCNN.forward in eval mode).
# ----------------------------------------------------------------------------
@partial(jax.jit, static_argnames=("tm1", "tm2"))
def flower_cnn_forward(x_nchw, params, *, tm1=512, tm2=256):
    N = x_nchw.shape[0]
    x = jnp.transpose(x_nchw, (0, 2, 3, 1)).astype(jnp.float32)       # -> NHWC
    Cin = x.shape[-1]

    # --- layer 1: conv1 (Cin->32, k=5) + maxpool2 + relu ------------------------------
    w1m = jnp.transpose(params["conv1_w"], (2, 3, 1, 0)).reshape(KH * KW * Cin, -1)
    w1m = _pad_to(_pad_to(w1m, 0, LANE), 1, LANE).astype(jnp.bfloat16)   # (128, 128)
    b1c = _pad_to(params["conv1_b"][None, :], 1, LANE)                   # (1, 128) f32
    p1, (Hp1, Wp1) = pooled_im2col(x, KH, KW, POOL)                      # (4, M, 25)
    p1 = _pad_to(p1, 2, LANE).astype(jnp.bfloat16)                       # (4, M, 128)
    y1 = conv_pool_relu(p1, w1m, b1c, tm=tm1)                            # (M, 128) f32

    # --- layer 2 + MLP head, fused into one Pallas call -------------------------------
    # Drop the padded channels before im2col: conv2 contraction is 25*32=800 (pad to 896),
    # not 25*128, cutting conv2 MXU passes and patch DMA ~4x.
    C1 = params["conv2_w"].shape[1]                                      # 32 real channels
    y1 = y1[:, :C1].reshape(N, Hp1, Wp1, C1)
    w2m = jnp.transpose(params["conv2_w"], (2, 3, 1, 0)).reshape(KH * KW * C1, -1)  # (800, 64)
    w2m = _pad_to(_pad_to(w2m, 0, LANE), 1, LANE).astype(jnp.bfloat16)   # (896, 128)
    b2c = _pad_to(params["conv2_b"][None, :], 1, LANE)                   # (1, 128) f32
    p2, (Hp2, Wp2) = pooled_im2col(y1, KH, KW, POOL)                     # (4, N*Hp2*Wp2, 800)
    p2 = _pad_to(p2, 2, LANE).astype(jnp.bfloat16)                       # (4, R, 896)

    # Flatten: conv2's pooled spatial output is 1x1 here, so the flattened features are
    # exactly the (zero-padded) conv2 channel vector (NCHW/NHWC orders coincide).
    fc1w = _pad_to(params["fc1_w"].T, 0, LANE).astype(jnp.bfloat16)      # (64,128)->(128,128)
    fc1b = params["fc1_b"][None, :]                                      # (1, 128) f32
    ncls = params["fc2_b"].shape[0]
    fc2w = _pad_to(params["fc2_w"].T, 1, LANE).astype(jnp.bfloat16)      # (128,3)->(128,128)
    fc2b = jnp.concatenate(
        [params["fc2_b"],
         jnp.full((LANE - ncls,), -1e30, jnp.float32)])[None, :]         # (1, 128)

    out = conv2_mlp_head(p2, w2m, b2c, fc1w, fc1b, fc2w, fc2b, tn=tm2)   # (R, 128)
    return out[:, :ncls]                                                 # (N, 3)


# ----------------------------------------------------------------------------
# Pure-JAX reference for validation.
# ----------------------------------------------------------------------------
def ref_forward(x_nchw, params):
    def conv(x, w, b):
        y = lax.conv_general_dilated(x, w, (1, 1), "VALID",
                                     dimension_numbers=("NCHW", "OIHW", "NCHW"))
        return y + b[None, :, None, None]

    def maxpool2(x):
        return lax.reduce_window(x, -jnp.inf, lax.max, (1, 1, 2, 2), (1, 1, 2, 2), "VALID")

    y = jnp.maximum(maxpool2(conv(x_nchw, params["conv1_w"], params["conv1_b"])), 0.0)
    y = jnp.maximum(maxpool2(conv(y, params["conv2_w"], params["conv2_b"])), 0.0)
    flat = y.reshape(y.shape[0], -1)
    h = jnp.maximum(flat @ params["fc1_w"].T + params["fc1_b"], 0.0)
    logits = h @ params["fc2_w"].T + params["fc2_b"]
    return jax.nn.log_softmax(logits, axis=1)


if __name__ == "__main__":
    N, H, W = 2, 16, 16
    # _calculate_flattened_size for HxW input:
    to_linear = 64 * (((H - 4) // 2 - 4) // 2) * (((W - 4) // 2 - 4) // 2)   # = 64

    key = jax.random.PRNGKey(0)
    ks = jax.random.split(key, 9)
    params = {
        "conv1_w": jax.random.normal(ks[0], (32, 1, 5, 5), jnp.float32) * 0.10,
        "conv1_b": jax.random.normal(ks[1], (32,), jnp.float32) * 0.10,
        "conv2_w": jax.random.normal(ks[2], (64, 32, 5, 5), jnp.float32) * 0.05,
        "conv2_b": jax.random.normal(ks[3], (64,), jnp.float32) * 0.10,
        "fc1_w":   jax.random.normal(ks[4], (128, to_linear), jnp.float32) * 0.05,
        "fc1_b":   jax.random.normal(ks[5], (128,), jnp.float32) * 0.10,
        "fc2_w":   jax.random.normal(ks[6], (3, 128), jnp.float32) * 0.05,
        "fc2_b":   jax.random.normal(ks[7], (3,), jnp.float32) * 0.10,
    }
    x = jax.random.normal(ks[8], (N, 1, H, W), jnp.float32)

    # tm1=48 exercises a real multi-step (pipelined, ragged-final-tile) grid even at this toy
    # size (conv1 has M = 2*6*6 = 72 pooled output rows); at 256x256 the default tm1=512 applies.
    out = jax.block_until_ready(flower_cnn_forward(x, params, tm1=48, tm2=256))
    ref = jax.block_until_ready(ref_forward(x, params))

    assert out.shape == (N, 3) and out.dtype == jnp.float32
    # Tolerance loosened for bf16 matmul operands (f32 accumulation), per the perf review.
    np.testing.assert_allclose(np.asarray(out), np.asarray(ref), atol=5e-2, rtol=5e-2)
    print("KERNEL_OK")
</pallas_src>

<mosaic_0001>
module attributes {stable_mosaic.version = 11 : i64} {
  func.func @_conv_pool_relu_kernel(%arg0: i32, %arg1: memref<4x48x128xbf16, #tpu.memory_space<vmem>>, %arg2: memref<128x128xbf16, #tpu.memory_space<vmem>>, %arg3: memref<1x128xf32, #tpu.memory_space<vmem>>, %arg4: memref<48x128xf32, #tpu.memory_space<vmem>>) attributes {dimension_semantics = [#tpu.dimension_semantics<parallel>], iteration_bounds = array<i64: 2>, scalar_prefetch = 0 : i64, scratch_operands = 0 : i64, tpu.core_type = #tpu.core_type<tc>, window_params = [{transform_indices = @transform_0, window_bounds = array<i64: 4, 48, 128>}, {pipeline_mode = #tpu.pipeline_mode<synchronous>, transform_indices = @transform_1, window_bounds = array<i64: 128, 128>}, {pipeline_mode = #tpu.pipeline_mode<synchronous>, transform_indices = @transform_2, window_bounds = array<i64: 1, 128>}, {transform_indices = @transform_3, window_bounds = array<i64: 48, 128>}]} {
    %c0 = arith.constant 0 : index
    %c0_0 = arith.constant 0 : index
    %0 = vector.load %arg2[%c0, %c0_0] : memref<128x128xbf16, #tpu.memory_space<vmem>>, vector<128x128xbf16>
    %c0_1 = arith.constant 0 : index
    %c0_2 = arith.constant 0 : index
    %c0_3 = arith.constant 0 : index
    %1 = vector.load %arg1[%c0_1, %c0_2, %c0_3] : memref<4x48x128xbf16, #tpu.memory_space<vmem>>, vector<1x48x128xbf16>
    %2 = vector.shape_cast %1 : vector<1x48x128xbf16> to vector<48x128xbf16>
    %cst = arith.constant dense<0.000000e+00> : vector<48x128xf32>
    %3 = tpu.matmul %2, %0, %cst {dimension_numbers = #tpu.dot_dimension_numbers<[1], [0], [0], [1], [0, 0, 1, 1], [], []>} : vector<48x128xbf16>, vector<128x128xbf16>, vector<48x128xf32> -> vector<48x128xf32>
    %c1 = arith.constant 1 : index
    %c0_4 = arith.constant 0 : index
    %c0_5 = arith.constant 0 : index
    %4 = vector.load %arg1[%c1, %c0_4, %c0_5] : memref<4x48x128xbf16, #tpu.memory_space<vmem>>, vector<1x48x128xbf16>
    %5 = vector.shape_cast %4 : vector<1x48x128xbf16> to vector<48x128xbf16>
    %cst_6 = arith.constant dense<0.000000e+00> : vector<48x128xf32>
    %6 = tpu.matmul %5, %0, %cst_6 {dimension_numbers = #tpu.dot_dimension_numbers<[1], [0], [0], [1], [0, 0, 1, 1], [], []>} : vector<48x128xbf16>, vector<128x128xbf16>, vector<48x128xf32> -> vector<48x128xf32>
    %c2 = arith.constant 2 : index
    %c0_7 = arith.constant 0 : index
    %c0_8 = arith.constant 0 : index
    %7 = vector.load %arg1[%c2, %c0_7, %c0_8] : memref<4x48x128xbf16, #tpu.memory_space<vmem>>, vector<1x48x128xbf16>
    %8 = vector.shape_cast %7 : vector<1x48x128xbf16> to vector<48x128xbf16>
    %cst_9 = arith.constant dense<0.000000e+00> : vector<48x128xf32>
    %9 = tpu.matmul %8, %0, %cst_9 {dimension_numbers = #tpu.dot_dimension_numbers<[1], [0], [0], [1], [0, 0, 1, 1], [], []>} : vector<48x128xbf16>, vector<128x128xbf16>, vector<48x128xf32> -> vector<48x128xf32>
    %c3 = arith.constant 3 : index
    %c0_10 = arith.constant 0 : index
    %c0_11 = arith.constant 0 : index
    %10 = vector.load %arg1[%c3, %c0_10, %c0_11] : memref<4x48x128xbf16, #tpu.memory_space<vmem>>, vector<1x48x128xbf16>
    %11 = vector.shape_cast %10 : vector<1x48x128xbf16> to vector<48x128xbf16>
    %cst_12 = arith.constant dense<0.000000e+00> : vector<48x128xf32>
    %12 = tpu.matmul %11, %0, %cst_12 {dimension_numbers = #tpu.dot_dimension_numbers<[1], [0], [0], [1], [0, 0, 1, 1], [], []>} : vector<48x128xbf16>, vector<128x128xbf16>, vector<48x128xf32> -> vector<48x128xf32>
    %13 = arith.maximumf %3, %6 : vector<48x128xf32>
    %14 = arith.maximumf %9, %12 : vector<48x128xf32>
    %15 = arith.maximumf %13, %14 : vector<48x128xf32>
    %c0_13 = arith.constant 0 : index
    %c0_14 = arith.constant 0 : index
    %16 = vector.load %arg3[%c0_13, %c0_14] : memref<1x128xf32, #tpu.memory_space<vmem>>, vector<1x128xf32>
    %17 = vector.broadcast %16 : vector<1x128xf32> to vector<48x128xf32>
    %18 = arith.addf %15, %17 : vector<48x128xf32>
    %cst_15 = arith.constant 0.000000e+00 : f32
    %19 = vector.broadcast %cst_15 : f32 to vector<48x128xf32>
    %20 = arith.maximumf %18, %19 : vector<48x128xf32>
    %c0_16 = arith.constant 0 : index
    %c0_17 = arith.constant 0 : index
    %21 = vector.load %arg4[%c0_16, %c0_17] : memref<48x128xf32, #tpu.memory_space<vmem>>, vector<48x128xf32>
    tpu.vector_store %arg4[%c0_16, %c0_17], %20 {strides = array<i32>} : memref<48x128xf32, #tpu.memory_space<vmem>>, vector<48x128xf32>,
    return
  }
  func.func @transform_0(%arg0: i32) -> (i32, i32, i32) {
    %c0_i32 = arith.constant 0 : i32
    %c0_i32_0 = arith.constant 0 : i32
    %c0_i32_1 = arith.constant 0 : i32
    return %c0_i32, %arg0, %c0_i32_0 : i32, i32, i32
  }
  func.func @transform_1(%arg0: i32) -> (i32, i32) {
    %c0_i32 = arith.constant 0 : i32
    %c0_i32_0 = arith.constant 0 : i32
    %c0_i32_1 = arith.constant 0 : i32
    return %c0_i32, %c0_i32_0 : i32, i32
  }
  func.func @transform_2(%arg0: i32) -> (i32, i32) {
    %c0_i32 = arith.constant 0 : i32
    %c0_i32_0 = arith.constant 0 : i32
    %c0_i32_1 = arith.constant 0 : i32
    return %c0_i32, %c0_i32_0 : i32, i32
  }
  func.func @transform_3(%arg0: i32) -> (i32, i32) {
    %c0_i32 = arith.constant 0 : i32
    %c0_i32_0 = arith.constant 0 : i32
    return %arg0, %c0_i32 : i32, i32
  }
}

module attributes {stable_mosaic.version = 11 : i64} {
  func.func @_conv2_mlp_kernel(%arg0: i32, %arg1: memref<4x2x896xbf16, #tpu.memory_space<vmem>>, %arg2: memref<896x128xbf16, #tpu.memory_space<vmem>>, %arg3: memref<1x128xf32, #tpu.memory_space<vmem>>, %arg4: memref<128x128xbf16, #tpu.memory_space<vmem>>, %arg5: memref<1x128xf32, #tpu.memory_space<vmem>>, %arg6: memref<128x128xbf16, #tpu.memory_space<vmem>>, %arg7: memref<1x128xf32, #tpu.memory_space<vmem>>, %arg8: memref<2x128xf32, #tpu.memory_space<vmem>>) attributes {dimension_semantics = [#tpu.dimension_semantics<parallel>], iteration_bounds = array<i64: 1>, scalar_prefetch = 0 : i64, scratch_operands = 0 : i64, tpu.core_type = #tpu.core_type<tc>, window_params = [{transform_indices = @transform_0, window_bounds = array<i64: 4, 2, 896>}, {pipeline_mode = #tpu.pipeline_mode<synchronous>, transform_indices = @transform_1, window_bounds = array<i64: 896, 128>}, {pipeline_mode = #tpu.pipeline_mode<synchronous>, transform_indices = @transform_2, window_bounds = array<i64: 1, 128>}, {pipeline_mode = #tpu.pipeline_mode<synchronous>, transform_indices = @transform_3, window_bounds = array<i64: 128, 128>}, {pipeline_mode = #tpu.pipeline_mode<synchronous>, transform_indices = @transform_4, window_bounds = array<i64: 1, 128>}, {pipeline_mode = #tpu.pipeline_mode<synchronous>, transform_indices = @transform_5, window_bounds = array<i64: 128, 128>}, {pipeline_mode = #tpu.pipeline_mode<synchronous>, transform_indices = @transform_6, window_bounds = array<i64: 1, 128>}, {transform_indices = @transform_7, window_bounds = array<i64: 2, 128>}]} {
    %c0 = arith.constant 0 : index
    %c0_0 = arith.constant 0 : index
    %0 = vector.load %arg2[%c0, %c0_0] : memref<896x128xbf16, #tpu.memory_space<vmem>>, vector<896x128xbf16>
    %c0_1 = arith.constant 0 : index
    %c0_2 = arith.constant 0 : index
    %c0_3 = arith.constant 0 : index
    %1 = vector.load %arg1[%c0_1, %c0_2, %c0_3] : memref<4x2x896xbf16, #tpu.memory_space<vmem>>, vector<1x2x896xbf16>
    %2 = vector.shape_cast %1 : vector<1x2x896xbf16> to vector<2x896xbf16>
    %cst = arith.constant dense<0.000000e+00> : vector<2x128xf32>
    %3 = tpu.matmul %2, %0, %cst {dimension_numbers = #tpu.dot_dimension_numbers<[1], [0], [0], [1], [0, 0, 1, 1], [], []>} : vector<2x896xbf16>, vector<896x128xbf16>, vector<2x128xf32> -> vector<2x128xf32>
    %c1 = arith.constant 1 : index
    %c0_4 = arith.constant 0 : index
    %c0_5 = arith.constant 0 : index
    %4 = vector.load %arg1[%c1, %c0_4, %c0_5] : memref<4x2x896xbf16, #tpu.memory_space<vmem>>, vector<1x2x896xbf16>
    %5 = vector.shape_cast %4 : vector<1x2x896xbf16> to vector<2x896xbf16>
    %cst_6 = arith.constant dense<0.000000e+00> : vector<2x128xf32>
    %6 = tpu.matmul %5, %0, %cst_6 {dimension_numbers = #tpu.dot_dimension_numbers<[1], [0], [0], [1], [0, 0, 1, 1], [], []>} : vector<2x896xbf16>, vector<896x128xbf16>, vector<2x128xf32> -> vector<2x128xf32>
    %c2 = arith.constant 2 : index
    %c0_7 = arith.constant 0 : index
    %c0_8 = arith.constant 0 : index
    %7 = vector.load %arg1[%c2, %c0_7, %c0_8] : memref<4x2x896xbf16, #tpu.memory_space<vmem>>, vector<1x2x896xbf16>
    %8 = vector.shape_cast %7 : vector<1x2x896xbf16> to vector<2x896xbf16>
    %cst_9 = arith.constant dense<0.000000e+00> : vector<2x128xf32>
    %9 = tpu.matmul %8, %0, %cst_9 {dimension_numbers = #tpu.dot_dimension_numbers<[1], [0], [0], [1], [0, 0, 1, 1], [], []>} : vector<2x896xbf16>, vector<896x128xbf16>, vector<2x128xf32> -> vector<2x128xf32>
    %c3 = arith.constant 3 : index
    %c0_10 = arith.constant 0 : index
    %c0_11 = arith.constant 0 : index
    %10 = vector.load %arg1[%c3, %c0_10, %c0_11] : memref<4x2x896xbf16, #tpu.memory_space<vmem>>, vector<1x2x896xbf16>
    %11 = vector.shape_cast %10 : vector<1x2x896xbf16> to vector<2x896xbf16>
    %cst_12 = arith.constant dense<0.000000e+00> : vector<2x128xf32>
    %12 = tpu.matmul %11, %0, %cst_12 {dimension_numbers = #tpu.dot_dimension_numbers<[1], [0], [0], [1], [0, 0, 1, 1], [], []>} : vector<2x896xbf16>, vector<896x128xbf16>, vector<2x128xf32> -> vector<2x128xf32>
    %13 = arith.maximumf %3, %6 : vector<2x128xf32>
    %14 = arith.maximumf %9, %12 : vector<2x128xf32>
    %15 = arith.maximumf %13, %14 : vector<2x128xf32>
    %c0_13 = arith.constant 0 : index
    %c0_14 = arith.constant 0 : index
    %16 = vector.load %arg3[%c0_13, %c0_14] : memref<1x128xf32, #tpu.memory_space<vmem>>, vector<1x128xf32>
    %17 = vector.broadcast %16 : vector<1x128xf32> to vector<2x128xf32>
    %18 = arith.addf %15, %17 : vector<2x128xf32>
    %cst_15 = arith.constant 0.000000e+00 : f32
    %19 = vector.broadcast %cst_15 : f32 to vector<2x128xf32>
    %20 = arith.maximumf %18, %19 : vector<2x128xf32>
    %21 = arith.truncf %20 : vector<2x128xf32> to vector<2x128xbf16>
    %c0_16 = arith.constant 0 : index
    %c0_17 = arith.constant 0 : index
    %22 = vector.load %arg4[%c0_16, %c0_17] : memref<128x128xbf16, #tpu.memory_space<vmem>>, vector<128x128xbf16>
    %cst_18 = arith.constant dense<0.000000e+00> : vector<2x128xf32>
    %23 = tpu.matmul %21, %22, %cst_18 {dimension_numbers = #tpu.dot_dimension_numbers<[1], [0], [0], [1], [0, 0, 1, 1], [], []>} : vector<2x128xbf16>, vector<128x128xbf16>, vector<2x128xf32> -> vector<2x128xf32>
    %c0_19 = arith.constant 0 : index
    %c0_20 = arith.constant 0 : index
    %24 = vector.load %arg5[%c0_19, %c0_20] : memref<1x128xf32, #tpu.memory_space<vmem>>, vector<1x128xf32>
    %25 = vector.broadcast %24 : vector<1x128xf32> to vector<2x128xf32>
    %26 = arith.addf %23, %25 : vector<2x128xf32>
    %cst_21 = arith.constant 0.000000e+00 : f32
    %27 = vector.broadcast %cst_21 : f32 to vector<2x128xf32>
    %28 = arith.maximumf %26, %27 : vector<2x128xf32>
    %29 = arith.truncf %28 : vector<2x128xf32> to vector<2x128xbf16>
    %c0_22 = arith.constant 0 : index
    %c0_23 = arith.constant 0 : index
    %30 = vector.load %arg6[%c0_22, %c0_23] : memref<128x128xbf16, #tpu.memory_space<vmem>>, vector<128x128xbf16>
    %cst_24 = arith.constant dense<0.000000e+00> : vector<2x128xf32>
    %31 = tpu.matmul %29, %30, %cst_24 {dimension_numbers = #tpu.dot_dimension_numbers<[1], [0], [0], [1], [0, 0, 1, 1], [], []>} : vector<2x128xbf16>, vector<128x128xbf16>, vector<2x128xf32> -> vector<2x128xf32>
    %c0_25 = arith.constant 0 : index
    %c0_26 = arith.constant 0 : index
    %32 = vector.load %arg7[%c0_25, %c0_26] : memref<1x128xf32, #tpu.memory_space<vmem>>, vector<1x128xf32>
    %33 = vector.broadcast %32 : vector<1x128xf32> to vector<2x128xf32>
    %34 = arith.addf %31, %33 : vector<2x128xf32>
    %cst_27 = arith.constant dense<0xFF800000> : vector<2xf32>
    %35 = vector.multi_reduction <maximumf>, %34, %cst_27 [1] : vector<2x128xf32> to vector<2xf32>
    %36 = vector.shape_cast %35 : vector<2xf32> to vector<2x1xf32>
    %37 = vector.broadcast %36 : vector<2x1xf32> to vector<2x128xf32>
    %38 = arith.subf %34, %37 : vector<2x128xf32>
    %39 = math.exp %38 : vector<2x128xf32>
    %cst_28 = arith.constant dense<0.000000e+00> : vector<2xf32>
    %40 = vector.multi_reduction <add>, %39, %cst_28 [1] : vector<2x128xf32> to vector<2xf32>
    %41 = vector.shape_cast %40 : vector<2xf32> to vector<2x1xf32>
    %42 = math.log %41 : vector<2x1xf32>
    %43 = vector.broadcast %42 : vector<2x1xf32> to vector<2x128xf32>
    %44 = arith.subf %38, %43 : vector<2x128xf32>
    %c0_29 = arith.constant 0 : index
    %c0_30 = arith.constant 0 : index
    %45 = vector.load %arg8[%c0_29, %c0_30] : memref<2x128xf32, #tpu.memory_space<vmem>>, vector<2x128xf32>
    tpu.vector_store %arg8[%c0_29, %c0_30], %44 {strides = array<i32>} : memref<2x128xf32, #tpu.memory_space<vmem>>, vector<2x128xf32>,
    return
  }
  func.func @transform_0(%arg0: i32) -> (i32, i32, i32) {
    %c0_i32 = arith.constant 0 : i32
    %c0_i32_0 = arith.constant 0 : i32
    %c0_i32_1 = arith.constant 0 : i32
    return %c0_i32, %arg0, %c0_i32_0 : i32, i32, i32
  }
  func.func @transform_1(%arg0: i32) -> (i32, i32) {
    %c0_i32 = arith.constant 0 : i32
    %c0_i32_0 = arith.constant 0 : i32
    %c0_i32_1 = arith.constant 0 : i32
    return %c0_i32, %c0_i32_0 : i32, i32
  }
  func.func @transform_2(%arg0: i32) -> (i32, i32) {
    %c0_i32 = arith.constant 0 : i32
    %c0_i32_0 = arith.constant 0 : i32
    %c0_i32_1 = arith.constant 0 : i32
    return %c0_i32, %c0_i32_0 : i32, i32
  }
  func.func @transform_3(%arg0: i32) -> (i32, i32) {
    %c0_i32 = arith.constant 0 : i32
    %c0_i32_0 = arith.constant 0 : i32
    %c0_i32_1 = arith.constant 0 : i32
    return %c0_i32, %c0_i32_0 : i32, i32
  }
  func.func @transform_4(%arg0: i32) -> (i32, i32) {
    %c0_i32 = arith.constant 0 : i32
    %c0_i32_0 = arith.constant 0 : i32
    %c0_i32_1 = arith.constant 0 : i32
    return %c0_i32, %c0_i32_0 : i32, i32
  }
  func.func @transform_5(%arg0: i32) -> (i32, i32) {
    %c0_i32 = arith.constant 0 : i32
    %c0_i32_0 = arith.constant 0 : i32
    %c0_i32_1 = arith.constant 0 : i32
    return %c0_i32, %c0_i32_0 : i32, i32
  }
  func.func @transform_6(%arg0: i32) -> (i32, i32) {
    %c0_i32 = arith.constant 0 : i32
    %c0_i32_0 = arith.constant 0 : i32
    %c0_i32_1 = arith.constant 0 : i32
    return %c0_i32, %c0_i32_0 : i32, i32
  }
  func.func @transform_7(%arg0: i32) -> (i32, i32) {
    %c0_i32 = arith.constant 0 : i32
    %c0_i32_0 = arith.constant 0 : i32
    return %arg0, %c0_i32 : i32, i32
  }
}

</mosaic_0001>

<llo_original>
// kernel: flower_cnn_forward.2
$region0: #{flower_cnn_forward.2}
  #allocation0 [shape = 'u32[]', space=smem, size = 0x4, offset = 0x4, fixed_abs, tag = 'smem constant byte address 0x4 - core index']
  #allocation1 [shape = 'u32[144,128]{1,0:T(1,128)}', space=vmem, size = 0x12000, scoped, tag = 'internal scratch']
  %s0 = inlined_call_operand.vmem [shape: bf16[4,72,128], index: 0, kind: input, shape index: {}]
  %s1 = inlined_call_operand.vmem [shape: bf16[128,128], index: 1, kind: input, shape index: {}]
  %s2 = inlined_call_operand.vmem [shape: f32[1,128], index: 2, kind: input, shape index: {}]
  %s3 = inlined_call_operand.vmem [shape: f32[72,128], index: 3, kind: output, shape index: {}]
  %s4 = sld [smem:[#allocation0]]
  $region155: #{flower_cnn_forward.2} parent=0
    _
  %s6 = ssub.s32 1, %s4
  %s7 = scalar_select 0, %s6, %s4
  $region1: #{flower_cnn_forward.2} parent=0
    #allocation2 [shape = 'u8[98304]{0}', space=vmem, size = 0x18000, scoped, tag = 'input window, operand 0']
    #allocation3 [shape = 'u8[49152]{0}', space=vmem, size = 0xc000, scoped, tag = 'output window, operand 0']
    loop: start=0, step=1, limit=4
    $region2: #{flower_cnn_forward.2} parent=1 // loop_pre_header
      _
    $region3: #{flower_cnn_forward.2} parent=1 // loop_header
      %s9 = sphi 0, %s13
      %p10 = scmp.ge.s32.totalorder %s9, 4
      %s19 = sphi 0, %s21
      %s22 = sphi 0, %s19
      %s23 = sphi 0, %s22
      %s39 = sphi 0, %s23
      %s43 = sphi 0, %s43
      %s45 = sphi 0, %s43
      %s46 = sphi 0, %s45
      %s60 = sphi 0, %s46
      %s64 = sphi 0, %s64
      %s66 = sphi 0, %s64
      %s67 = sphi 0, %s66
      %s81 = sphi 0, %s67
      %s87 = sphi 0, %s89
      %s90 = sphi 0, %s87
      %s91 = sphi 0, %s90
      %s107 = sphi 0, %s91
    $region4: #{flower_cnn_forward.2} parent=1 // loop_header_branch
      %12 = sbr.rel (%p10) target = $region8
    $region5: #{flower_cnn_forward.2} parent=1 // loop_body
      %s14 = ssub.s32 %s9, 1
      %s15 = ssub.s32 %s9, 2
      %s16 = sadd.s32 %s9, 1
      %s17 = ssub.s32 %s9, %s16
      %p18 = scmp.eq.s32.totalorder %s17, 0
      %s20 = sadd.s32 %s19, 1
      %s21 = scalar_select %p18, %s19, %s20
      %p24 = pneg %p18
      %p25 = scmp.eq.s32.totalorder %s9, 1
      %p26 = por %p24, %p25
      %p27 = scmp.ne.s32.totalorder %s19, %s22
      %p28 = scmp.eq.s32.totalorder %s9, 0
      %p29 = por %p27, %p28
      %p30 = scmp.ne.s32.totalorder %s19, %s22
      %p31 = scmp.eq.s32.totalorder %s14, 1
      %p32 = por %p30, %p31
      %p33 = scmp.ne.s32.totalorder %s22, %s23
      %p34 = scmp.eq.s32.totalorder %s14, 0
      %p35 = por %p33, %p34
      %p36 = scmp.ne.s32.totalorder %s22, %s23
      %p37 = scmp.eq.s32.totalorder %s15, 1
      %p38 = por %p36, %p37
      %p40 = scmp.ne.s32.totalorder %s23, %s39
      %p41 = scmp.eq.s32.totalorder %s15, 0
      %p42 = por %p40, %p41
      %s44 = sadd.s32 %s43, 1
      %p47 = scmp.eq.s32.totalorder %s9, 1
      %p48 = scmp.ne.s32.totalorder %s43, %s45
      %p49 = scmp.eq.s32.totalorder %s9, 0
      %p50 = por %p48, %p49
      %p51 = scmp.ne.s32.totalorder %s43, %s45
      %p52 = scmp.eq.s32.totalorder %s14, 1
      %p53 = por %p51, %p52
      %p54 = scmp.ne.s32.totalorder %s45, %s46
      %p55 = scmp.eq.s32.totalorder %s14, 0
      %p56 = por %p54, %p55
      %p57 = scmp.ne.s32.totalorder %s45, %s46
      %p58 = scmp.eq.s32.totalorder %s15, 1
      %p59 = por %p57, %p58
      %p61 = scmp.ne.s32.totalorder %s46, %s60
      %p62 = scmp.eq.s32.totalorder %s15, 0
      %p63 = por %p61, %p62
      %s65 = sadd.s32 %s64, 1
      %p68 = scmp.eq.s32.totalorder %s9, 1
      %p69 = scmp.ne.s32.totalorder %s64, %s66
      %p70 = scmp.eq.s32.totalorder %s9, 0
      %p71 = por %p69, %p70
      %p72 = scmp.ne.s32.totalorder %s64, %s66
      %p73 = scmp.eq.s32.totalorder %s14, 1
      %p74 = por %p72, %p73
      %p75 = scmp.ne.s32.totalorder %s66, %s67
      %p76 = scmp.eq.s32.totalorder %s14, 0
      %p77 = por %p75, %p76
      %p78 = scmp.ne.s32.totalorder %s66, %s67
      %p79 = scmp.eq.s32.totalorder %s15, 1
      %p80 = por %p78, %p79
      %p82 = scmp.ne.s32.totalorder %s67, %s81
      %p83 = scmp.eq.s32.totalorder %s15, 0
      %p84 = por %p82, %p83
      %s85 = ssub.s32 %s9, %s16
      %p86 = scmp.eq.s32.totalorder %s85, 0
      %s88 = sadd.s32 %s87, 1
      %s89 = scalar_select %p86, %s87, %s88
      %p92 = pneg %p86
      %p93 = scmp.eq.s32.totalorder %s9, 1
      %p94 = por %p92, %p93
      %p95 = scmp.ne.s32.totalorder %s87, %s90
      %p96 = scmp.eq.s32.totalorder %s9, 0
      %p97 = por %p95, %p96
      %p98 = scmp.ne.s32.totalorder %s87, %s90
      %p99 = scmp.eq.s32.totalorder %s14, 1
      %p100 = por %p98, %p99
      %p101 = scmp.ne.s32.totalorder %s90, %s91
      %p102 = scmp.eq.s32.totalorder %s14, 0
      %p103 = por %p101, %p102
      %p104 = scmp.ne.s32.totalorder %s90, %s91
      %p105 = scmp.eq.s32.totalorder %s15, 1
      %p106 = por %p104, %p105
      %p108 = scmp.ne.s32.totalorder %s91, %s107
      %p109 = scmp.eq.s32.totalorder %s15, 0
      %p110 = por %p108, %p109
      %p111 = scmp.le.s32.totalorder 1, %s9
      %p112 = scmp.lt.s32.totalorder %s9, 3
      %p113 = pnand %p111, %p112
      %p114 = pneg %p113
      // Predicated region
      $region9: #{flower_cnn_forward.2} parent=5 // pred_check
        _
      $region10: #{flower_cnn_forward.2} parent=5 // pred_check_branch
        %116 = sbr.rel (%p113) target = $region12
      $region11: #{flower_cnn_forward.2} parent=5 // pred_region
        %s117 = ssub.s32 %s9, 1
        // Predicated region
        $region13: #{flower_cnn_forward.2} parent=11 // pred_check
          %p118 = pneg %p56
        $region14: #{flower_cnn_forward.2} parent=11 // pred_check_branch
          %120 = sbr.rel (%p118) target = $region16
        $region15: #{flower_cnn_forward.2} parent=11 // pred_region
          _
        $region16: #{flower_cnn_forward.2} parent=11 // pred_fallthru
          _
        // Predicated region
        $region17: #{flower_cnn_forward.2} parent=11 // pred_check
          %p121 = pneg %p77
        $region18: #{flower_cnn_forward.2} parent=11 // pred_check_branch
          %123 = sbr.rel (%p121) target = $region20
        $region19: #{flower_cnn_forward.2} parent=11 // pred_region
          _
        $region20: #{flower_cnn_forward.2} parent=11 // pred_fallthru
          _
      $region12: #{flower_cnn_forward.2} parent=5 // pred_fallthru
        _
      %p124 = scmp.lt.s32.totalorder %s9, 2
      // Predicated region
      $region21: #{flower_cnn_forward.2} parent=5 // pred_check
        %p125 = pneg %p124
      $region22: #{flower_cnn_forward.2} parent=5 // pred_check_branch
        %127 = sbr.rel (%p125) target = $region24
      $region23: #{flower_cnn_forward.2} parent=5 // pred_region
        // Predicated region
        $region25: #{flower_cnn_forward.2} parent=23 // pred_check
          %p128 = pneg %p29
        $region26: #{flower_cnn_forward.2} parent=23 // pred_check_branch
          %130 = sbr.rel (%p128) target = $region28
        $region27: #{flower_cnn_forward.2} parent=23 // pred_region
          %s131 = sand.u32 %s19, 1
          %s132 = sand.u32 %s19, 1
          %s133 = smul.addr %s132, 96
          %s134 = scalar_lea.vmem [#allocation2], %s133
          %s135 = smul.u32 6, %s9
          %s136 = ssub.s32 9, %s135
          %p137 = scmp.lt.s32.totalorder %s136, 6
          %s138 = scalar_select %p137, %s136, 6
          %s139 = smul.u32 256, %s138
          %p140 = scmp.ne.s32.totalorder 0, %s139
          %s141 = smul.addr %s135, 4
          %s142 = scalar_lea.vmem %s0, %s141
          // Predicated region
          $region29: #{flower_cnn_forward.2} parent=27 // pred_check
            %p143 = pneg %p140
          $region30: #{flower_cnn_forward.2} parent=27 // pred_check_branch
            %145 = sbr.rel (%p143) target = $region32
          $region31: #{flower_cnn_forward.2} parent=27 // pred_region
            // Predicated region
            $region33: #{flower_cnn_forward.2} parent=31 // pred_check
              _
            $region34: #{flower_cnn_forward.2} parent=31 // pred_check_branch
              %147 = sbr.rel target = $region36
            $region35: #{flower_cnn_forward.2} parent=31 // pred_region
              // Predicated region
              $region55: #{flower_cnn_forward.2} parent=35 // pred_check
                _
              $region56: #{flower_cnn_forward.2} parent=35 // pred_check_branch
                %249 = sbr.rel (0) target = $region58
              $region57: #{flower_cnn_forward.2} parent=35 // pred_region
                %s250 = sdiv.u32.pop %s138, 6
                %s251 = srem.u32.pop %s138, 6
                // While loop
                $region59: #{flower_cnn_forward.2} parent=57 // loop_pre_header
                  _
                $region60: #{flower_cnn_forward.2} parent=57 // loop_header
                  %s253 = sphi 0, %s255
                  %p254 = scmp.ge.s32.totalorder %s253, %s250
                  %s258 = sphi 0, %s263
                  %s259 = sphi %s142, %s266
                  %s260 = sphi %s134, %s267
                $region61: #{flower_cnn_forward.2} parent=57 // loop_header_branch
                  %257 = sbr.rel (%p254) target = $region65
                $region62: #{flower_cnn_forward.2} parent=57 // loop_body
                  %s261 = sadd.s32 1, %s258
                  %p262 = scmp.ge.s32.totalorder %s261, %s250
                  %s263 = scalar_select %p262, 0, %s261
                  %s264 = smul.u32 %s263, 24
                  %s265 = smul.u32 %s263, 24
                  %s266 = scalar_lea.vmem %s142, %s264
                  %s267 = scalar_lea.vmem %s134, %s265 [#allocation2]
                $region63: #{flower_cnn_forward.2} parent=57 // loop_footer
                  %s255 = sadd.s32 %s253, 1
                $region64: #{flower_cnn_forward.2} parent=57 // loop_footer_branch
                  %252 = sbr.rel target = $region60
                $region65: #{flower_cnn_forward.2} parent=57 // loop_exit
                  _
                %s268 = sdiv.u32.pop %s138, 6
                %s269 = srem.u32.pop %s138, 6
                %s270 = smul.u32 %s268, 6
                %s271 = smul.u32 4, %s270
                %s272 = scalar_lea.vmem %s142, %s271
                %s273 = smul.u32 4, %s270
                %s274 = scalar_lea.vmem %s134, %s273 [#allocation2]
                // While loop
                $region66: #{flower_cnn_forward.2} parent=57 // loop_pre_header
                  _
                $region67: #{flower_cnn_forward.2} parent=57 // loop_header
                  %s276 = sphi 0, %s278
                  %p277 = scmp.ge.s32.totalorder %s276, %s269
                  %s281 = sphi 0, %s286
                  %s282 = sphi %s272, %s289
                  %s283 = sphi %s274, %s290
                $region68: #{flower_cnn_forward.2} parent=57 // loop_header_branch
                  %280 = sbr.rel (%p277) target = $region72
                $region69: #{flower_cnn_forward.2} parent=57 // loop_body
                  %s284 = sadd.s32 1, %s281
                  %p285 = scmp.ge.s32.totalorder %s284, %s269
                  %s286 = scalar_select %p285, 0, %s284
                  %s287 = smul.u32 %s286, 4
                  %s288 = smul.u32 %s286, 4
                  %s289 = scalar_lea.vmem %s272, %s287
                  %s290 = scalar_lea.vmem %s274, %s288 [#allocation2]
                $region70: #{flower_cnn_forward.2} parent=57 // loop_footer
                  %s278 = sadd.s32 %s276, 1
                $region71: #{flower_cnn_forward.2} parent=57 // loop_footer_branch
                  %275 = sbr.rel target = $region67
                $region72: #{flower_cnn_forward.2} parent=57 // loop_exit
                  _
                %s292 = sdiv.u32.pop %s138, 6
                %s293 = srem.u32.pop %s138, 6
                // While loop
                $region73: #{flower_cnn_forward.2} parent=57 // loop_pre_header
                  _
                $region74: #{flower_cnn_forward.2} parent=57 // loop_header
                  %s295 = sphi 0, %s297
                  %p296 = scmp.ge.s32.totalorder %s295, %s292
                  %s300 = sphi 0, %s353
                  %s301 = sphi %s142, %s356
                  %s302 = sphi %s134, %s357
                $region75: #{flower_cnn_forward.2} parent=57 // loop_header_branch
                  %299 = sbr.rel (%p296) target = $region79
                $region76: #{flower_cnn_forward.2} parent=57 // loop_body
                  %v303 = vld [vmem:[%s301] sm:$0xf]
                  %304 = vst [vmem:[%s302] sm:$0xf] %v303
                  %v305 = vld [vmem:[%s301 + $0x4] sm:$0xf]
                  %306 = vst [vmem:[%s302 + $0x4] sm:$0xf] %v305
                  %v307 = vld [vmem:[%s301 + $0x8] sm:$0xf]
                  %308 = vst [vmem:[%s302 + $0x8] sm:$0xf] %v307
                  %v309 = vld [vmem:[%s301 + $0xc] sm:$0xf]
                  %310 = vst [vmem:[%s302 + $0xc] sm:$0xf] %v309
                  %v311 = vld [vmem:[%s301 + $0x10] sm:$0xf]
                  %312 = vst [vmem:[%s302 + $0x10] sm:$0xf] %v311
                  %v313 = vld [vmem:[%s301 + $0x14] sm:$0xf]
                  %314 = vst [vmem:[%s302 + $0x14] sm:$0xf] %v313
                  %v315 = vld [vmem:[%s301 + $0x24] sm:$0xf]
                  %316 = vst [vmem:[%s302 + $0x18] sm:$0xf] %v315
                  %v317 = vld [vmem:[%s301 + $0x28] sm:$0xf]
                  %318 = vst [vmem:[%s302 + $0x1c] sm:$0xf] %v317
                  %v319 = vld [vmem:[%s301 + $0x2c] sm:$0xf]
                  %320 = vst [vmem:[%s302 + $0x20] sm:$0xf] %v319
                  %v321 = vld [vmem:[%s301 + $0x30] sm:$0xf]
                  %322 = vst [vmem:[%s302 + $0x24] sm:$0xf] %v321
                  %v323 = vld [vmem:[%s301 + $0x34] sm:$0xf]
                  %324 = vst [vmem:[%s302 + $0x28] sm:$0xf] %v323
                  %v325 = vld [vmem:[%s301 + $0x38] sm:$0xf]
                  %326 = vst [vmem:[%s302 + $0x2c] sm:$0xf] %v325
                  %v327 = vld [vmem:[%s301 + $0x48] sm:$0xf]
                  %328 = vst [vmem:[%s302 + $0x30] sm:$0xf] %v327
                  %v329 = vld [vmem:[%s301 + $0x4c] sm:$0xf]
                  %330 = vst [vmem:[%s302 + $0x34] sm:$0xf] %v329
                  %v331 = vld [vmem:[%s301 + $0x50] sm:$0xf]
                  %332 = vst [vmem:[%s302 + $0x38] sm:$0xf] %v331
                  %v333 = vld [vmem:[%s301 + $0x54] sm:$0xf]
                  %334 = vst [vmem:[%s302 + $0x3c] sm:$0xf] %v333
                  %v335 = vld [vmem:[%s301 + $0x58] sm:$0xf]
                  %336 = vst [vmem:[%s302 + $0x40] sm:$0xf] %v335
                  %v337 = vld [vmem:[%s301 + $0x5c] sm:$0xf]
                  %338 = vst [vmem:[%s302 + $0x44] sm:$0xf] %v337
                  %v339 = vld [vmem:[%s301 + $0x6c] sm:$0xf]
                  %340 = vst [vmem:[%s302 + $0x48] sm:$0xf] %v339
                  %v341 = vld [vmem:[%s301 + $0x70] sm:$0xf]
                  %342 = vst [vmem:[%s302 + $0x4c] sm:$0xf] %v341
                  %v343 = vld [vmem:[%s301 + $0x74] sm:$0xf]
                  %344 = vst [vmem:[%s302 + $0x50] sm:$0xf] %v343
                  %v345 = vld [vmem:[%s301 + $0x78] sm:$0xf]
                  %346 = vst [vmem:[%s302 + $0x54] sm:$0xf] %v345
                  %v347 = vld [vmem:[%s301 + $0x7c] sm:$0xf]
                  %348 = vst [vmem:[%s302 + $0x58] sm:$0xf] %v347
                  %v349 = vld [vmem:[%s301 + $0x80] sm:$0xf]
                  %350 = vst [vmem:[%s302 + $0x5c] sm:$0xf] %v349
                  %s351 = sadd.s32 1, %s300
                  %p352 = scmp.ge.s32.totalorder %s351, %s292
                  %s353 = scalar_select %p352, 0, %s351
                  %s354 = smul.u32 %s353, 24
                  %s355 = smul.u32 %s353, 24
                  %s356 = scalar_lea.vmem %s142, %s354
                  %s357 = scalar_lea.vmem %s134, %s355 [#allocation2]
                $region77: #{flower_cnn_forward.2} parent=57 // loop_footer
                  %s297 = sadd.s32 %s295, 1
                $region78: #{flower_cnn_forward.2} parent=57 // loop_footer_branch
                  %294 = sbr.rel target = $region74
                $region79: #{flower_cnn_forward.2} parent=57 // loop_exit
                  _
                %s358 = sdiv.u32.pop %s138, 6
                %s359 = srem.u32.pop %s138, 6
                %s360 = smul.u32 %s358, 6
                %s361 = smul.u32 4, %s360
                %s362 = scalar_lea.vmem %s142, %s361
                %s363 = smul.u32 4, %s360
                %s364 = scalar_lea.vmem %s134, %s363 [#allocation2]
                // While loop
                $region80: #{flower_cnn_forward.2} parent=57 // loop_pre_header
                  _
                $region81: #{flower_cnn_forward.2} parent=57 // loop_header
                  %s366 = sphi 0, %s368
                  %p367 = scmp.ge.s32.totalorder %s366, %s359
                  %s371 = sphi 0, %s384
                  %s372 = sphi %s362, %s387
                  %s373 = sphi %s364, %s388
                $region82: #{flower_cnn_forward.2} parent=57 // loop_header_branch
                  %370 = sbr.rel (%p367) target = $region86
                $region83: #{flower_cnn_forward.2} parent=57 // loop_body
                  %v374 = vld [vmem:[%s372] sm:$0xf]
                  %375 = vst [vmem:[%s373] sm:$0xf] %v374
                  %v376 = vld [vmem:[%s372 + $0x24] sm:$0xf]
                  %377 = vst [vmem:[%s373 + $0x18] sm:$0xf] %v376
                  %v378 = vld [vmem:[%s372 + $0x48] sm:$0xf]
                  %379 = vst [vmem:[%s373 + $0x30] sm:$0xf] %v378
                  %v380 = vld [vmem:[%s372 + $0x6c] sm:$0xf]
                  %381 = vst [vmem:[%s373 + $0x48] sm:$0xf] %v380
                  %s382 = sadd.s32 1, %s371
                  %p383 = scmp.ge.s32.totalorder %s382, %s359
                  %s384 = scalar_select %p383, 0, %s382
                  %s385 = smul.u32 %s384, 4
                  %s386 = smul.u32 %s384, 4
                  %s387 = scalar_lea.vmem %s362, %s385
                  %s388 = scalar_lea.vmem %s364, %s386 [#allocation2]
                $region84: #{flower_cnn_forward.2} parent=57 // loop_footer
                  %s368 = sadd.s32 %s366, 1
                $region85: #{flower_cnn_forward.2} parent=57 // loop_footer_branch
                  %365 = sbr.rel target = $region81
                $region86: #{flower_cnn_forward.2} parent=57 // loop_exit
                  _
              $region58: #{flower_cnn_forward.2} parent=35 // pred_fallthru
                _
            $region36: #{flower_cnn_forward.2} parent=31 // pred_fallthru
              _
            // Predicated region
            $region37: #{flower_cnn_forward.2} parent=31 // pred_check
              _
            $region38: #{flower_cnn_forward.2} parent=31 // pred_check_branch
              %149 = sbr.rel (0) target = $region40
            $region39: #{flower_cnn_forward.2} parent=31 // pred_region
              %s151 = sdiv.u32.pop %s138, 6
              %s152 = srem.u32.pop %s138, 6
              // While loop
              $region41: #{flower_cnn_forward.2} parent=39 // loop_pre_header
                _
              $region42: #{flower_cnn_forward.2} parent=39 // loop_header
                %s154 = sphi 0, %s156
                %p155 = scmp.ge.s32.totalorder %s154, %s151
                %s159 = sphi 0, %s212
                %s160 = sphi %s142, %s215
                %s161 = sphi %s134, %s216
              $region43: #{flower_cnn_forward.2} parent=39 // loop_header_branch
                %158 = sbr.rel (%p155) target = $region47
              $region44: #{flower_cnn_forward.2} parent=39 // loop_body
                %v162 = vld [vmem:[%s160] sm:$0xf]
                %163 = vst [vmem:[%s161] sm:$0xf] %v162
                %v164 = vld [vmem:[%s160 + $0x4] sm:$0xf]
                %165 = vst [vmem:[%s161 + $0x4] sm:$0xf] %v164
                %v166 = vld [vmem:[%s160 + $0x8] sm:$0xf]
                %167 = vst [vmem:[%s161 + $0x8] sm:$0xf] %v166
                %v168 = vld [vmem:[%s160 + $0xc] sm:$0xf]
                %169 = vst [vmem:[%s161 + $0xc] sm:$0xf] %v168
                %v170 = vld [vmem:[%s160 + $0x10] sm:$0xf]
                %171 = vst [vmem:[%s161 + $0x10] sm:$0xf] %v170
                %v172 = vld [vmem:[%s160 + $0x14] sm:$0xf]
                %173 = vst [vmem:[%s161 + $0x14] sm:$0xf] %v172
                %v174 = vld [vmem:[%s160 + $0x24] sm:$0xf]
                %175 = vst [vmem:[%s161 + $0x18] sm:$0xf] %v174
                %v176 = vld [vmem:[%s160 + $0x28] sm:$0xf]
                %177 = vst [vmem:[%s161 + $0x1c] sm:$0xf] %v176
                %v178 = vld [vmem:[%s160 + $0x2c] sm:$0xf]
                %179 = vst [vmem:[%s161 + $0x20] sm:$0xf] %v178
                %v180 = vld [vmem:[%s160 + $0x30] sm:$0xf]
                %181 = vst [vmem:[%s161 + $0x24] sm:$0xf] %v180
                %v182 = vld [vmem:[%s160 + $0x34] sm:$0xf]
                %183 = vst [vmem:[%s161 + $0x28] sm:$0xf] %v182
                %v184 = vld [vmem:[%s160 + $0x38] sm:$0xf]
                %185 = vst [vmem:[%s161 + $0x2c] sm:$0xf] %v184
                %v186 = vld [vmem:[%s160 + $0x48] sm:$0xf]
                %187 = vst [vmem:[%s161 + $0x30] sm:$0xf] %v186
                %v188 = vld [vmem:[%s160 + $0x4c] sm:$0xf]
                %189 = vst [vmem:[%s161 + $0x34] sm:$0xf] %v188
                %v190 = vld [vmem:[%s160 + $0x50] sm:$0xf]
                %191 = vst [vmem:[%s161 + $0x38] sm:$0xf] %v190
                %v192 = vld [vmem:[%s160 + $0x54] sm:$0xf]
                %193 = vst [vmem:[%s161 + $0x3c] sm:$0xf] %v192
                %v194 = vld [vmem:[%s160 + $0x58] sm:$0xf]
                %195 = vst [vmem:[%s161 + $0x40] sm:$0xf] %v194
                %v196 = vld [vmem:[%s160 + $0x5c] sm:$0xf]
                %197 = vst [vmem:[%s161 + $0x44] sm:$0xf] %v196
                %v198 = vld [vmem:[%s160 + $0x6c] sm:$0xf]
                %199 = vst [vmem:[%s161 + $0x48] sm:$0xf] %v198
                %v200 = vld [vmem:[%s160 + $0x70] sm:$0xf]
                %201 = vst [vmem:[%s161 + $0x4c] sm:$0xf] %v200
                %v202 = vld [vmem:[%s160 + $0x74] sm:$0xf]
                %203 = vst [vmem:[%s161 + $0x50] sm:$0xf] %v202
                %v204 = vld [vmem:[%s160 + $0x78] sm:$0xf]
                %205 = vst [vmem:[%s161 + $0x54] sm:$0xf] %v204
                %v206 = vld [vmem:[%s160 + $0x7c] sm:$0xf]
                %207 = vst [vmem:[%s161 + $0x58] sm:$0xf] %v206
                %v208 = vld [vmem:[%s160 + $0x80] sm:$0xf]
                %209 = vst [vmem:[%s161 + $0x5c] sm:$0xf] %v208
                %s210 = sadd.s32 1, %s159
                %p211 = scmp.ge.s32.totalorder %s210, %s151
                %s212 = scalar_select %p211, 0, %s210
                %s213 = smul.u32 %s212, 24
                %s214 = smul.u32 %s212, 24
                %s215 = scalar_lea.vmem %s142, %s213
                %s216 = scalar_lea.vmem %s134, %s214 [#allocation2]
              $region45: #{flower_cnn_forward.2} parent=39 // loop_footer
                %s156 = sadd.s32 %s154, 1
              $region46: #{flower_cnn_forward.2} parent=39 // loop_footer_branch
                %153 = sbr.rel target = $region42
              $region47: #{flower_cnn_forward.2} parent=39 // loop_exit
                _
              %s217 = sdiv.u32.pop %s138, 6
              %s218 = srem.u32.pop %s138, 6
              %s219 = smul.u32 %s217, 6
              %s220 = smul.u32 4, %s219
              %s221 = scalar_lea.vmem %s142, %s220
              %s222 = smul.u32 4, %s219
              %s223 = scalar_lea.vmem %s134, %s222 [#allocation2]
              // While loop
              $region48: #{flower_cnn_forward.2} parent=39 // loop_pre_header
                _
              $region49: #{flower_cnn_forward.2} parent=39 // loop_header
                %s225 = sphi 0, %s227
                %p226 = scmp.ge.s32.totalorder %s225, %s218
                %s230 = sphi 0, %s243
                %s231 = sphi %s221, %s246
                %s232 = sphi %s223, %s247
              $region50: #{flower_cnn_forward.2} parent=39 // loop_header_branch
                %229 = sbr.rel (%p226) target = $region54
              $region51: #{flower_cnn_forward.2} parent=39 // loop_body
                %v233 = vld [vmem:[%s231] sm:$0xf]
                %234 = vst [vmem:[%s232] sm:$0xf] %v233
                %v235 = vld [vmem:[%s231 + $0x24] sm:$0xf]
                %236 = vst [vmem:[%s232 + $0x18] sm:$0xf] %v235
                %v237 = vld [vmem:[%s231 + $0x48] sm:$0xf]
                %238 = vst [vmem:[%s232 + $0x30] sm:$0xf] %v237
                %v239 = vld [vmem:[%s231 + $0x6c] sm:$0xf]
                %240 = vst [vmem:[%s232 + $0x48] sm:$0xf] %v239
                %s241 = sadd.s32 1, %s230
                %p242 = scmp.ge.s32.totalorder %s241, %s218
                %s243 = scalar_select %p242, 0, %s241
                %s244 = smul.u32 %s243, 4
                %s245 = smul.u32 %s243, 4
                %s246 = scalar_lea.vmem %s221, %s244
                %s247 = scalar_lea.vmem %s223, %s245 [#allocation2]
              $region52: #{flower_cnn_forward.2} parent=39 // loop_footer
                %s227 = sadd.s32 %s225, 1
              $region53: #{flower_cnn_forward.2} parent=39 // loop_footer_branch
                %224 = sbr.rel target = $region49
              $region54: #{flower_cnn_forward.2} parent=39 // loop_exit
                _
            $region40: #{flower_cnn_forward.2} parent=31 // pred_fallthru
              _
          $region32: #{flower_cnn_forward.2} parent=27 // pred_fallthru
            _
          %389 = vnop
        $region28: #{flower_cnn_forward.2} parent=23 // pred_fallthru
          _
      $region24: #{flower_cnn_forward.2} parent=5 // pred_fallthru
        _
      %p390 = scmp.le.s32.totalorder 1, %s9
      %p391 = scmp.lt.s32.totalorder %s9, 3
      %p392 = pnand %p390, %p391
      %p393 = pneg %p392
      // Predicated region
      $region87: #{flower_cnn_forward.2} parent=5 // pred_check
        _
      $region88: #{flower_cnn_forward.2} parent=5 // pred_check_branch
        %395 = sbr.rel (%p392) target = $region90
      $region89: #{flower_cnn_forward.2} parent=5 // pred_region
        %s396 = ssub.s32 %s9, 1
        %s397 = sand.u32 %s22, 1
        %s398 = sand.u32 %s22, 1
        %s399 = smul.addr %s398, 96
        %s400 = scalar_lea.vmem [#allocation2], %s399
        // Predicated region
        $region91: #{flower_cnn_forward.2} parent=89 // pred_check
          %p401 = pneg %p35
        $region92: #{flower_cnn_forward.2} parent=89 // pred_check_branch
          %403 = sbr.rel (%p401) target = $region94
        $region93: #{flower_cnn_forward.2} parent=89 // pred_region
          _
        $region94: #{flower_cnn_forward.2} parent=89 // pred_fallthru
          _
        %s404 = sand.u32 %s22, 1
        %s405 = sand.u32 %s22, 1
        %s406 = smul.addr %s405, 96
        %s407 = scalar_lea.vmem [#allocation2], %s406
        %p408 = pneg %p35
        %p409 = pneg %p32
        %p410 = pneg %p56
        %p411 = pneg %p53
        %p412 = pneg %p77
        %p413 = pneg %p74
        %p414 = pneg %p103
        %p415 = pneg %p100
        %s416 = sand.u32 %s90, 1
        %s417 = sand.u32 %s90, 1
        %s418 = smul.addr %s417, 48
        %s419 = scalar_lea.vmem [#allocation3], %s418
        %s420 = smul.u32 6, %s14
        %s421 = ssub.s32 9, %s420
        %p422 = scmp.lt.s32.totalorder %s421, 6
        %s423 = scalar_select %p422, %s421, 6
        %s424 = smul.u32 256, %s423
        %s425 = smul.u32 6, %s14
        %s426 = ssub.s32 9, %s425
        %p427 = scmp.lt.s32.totalorder %s426, 6
        %s428 = scalar_select %p427, %s426, 6
        %s429 = smul.u32 128, %s428
        %v431 = vld [vmem:[%s1] sm:$0xf]
        %v432 = vld [vmem:[%s1 + $0x4] sm:$0xf]
        %v433 = vld [vmem:[%s1 + $0x8] sm:$0xf]
        %v434 = vld [vmem:[%s1 + $0xc] sm:$0xf]
        %v435 = vld [vmem:[%s1 + $0x10] sm:$0xf]
        %v436 = vld [vmem:[%s1 + $0x14] sm:$0xf]
        %v437 = vld [vmem:[%s1 + $0x18] sm:$0xf]
        %v438 = vld [vmem:[%s1 + $0x1c] sm:$0xf]
        %v439 = vld [vmem:[%s1 + $0x20] sm:$0xf]
        %v440 = vld [vmem:[%s1 + $0x24] sm:$0xf]
        %v441 = vld [vmem:[%s1 + $0x28] sm:$0xf]
        %v442 = vld [vmem:[%s1 + $0x2c] sm:$0xf]
        %v443 = vld [vmem:[%s1 + $0x30] sm:$0xf]
        %v444 = vld [vmem:[%s1 + $0x34] sm:$0xf]
        %v445 = vld [vmem:[%s1 + $0x38] sm:$0xf]
        %v446 = vld [vmem:[%s1 + $0x3c] sm:$0xf]
        %v447 = vld [vmem:[%s400] sm:$0xf]
        %v448 = vld [vmem:[%s400 + $0x4] sm:$0xf]
        %v449 = vld [vmem:[%s400 + $0x8] sm:$0xf]
        %v450 = vld [vmem:[%s400 + $0xc] sm:$0xf]
        %v451 = vld [vmem:[%s400 + $0x10] sm:$0xf]
        %v452 = vld [vmem:[%s400 + $0x14] sm:$0xf]
        %v459 = vunpack.c.l.b16 %v447
        %v460 = vunpack.c.l.b16 %v448
        %v461 = vunpack.c.l.b16 %v449
        %v462 = vunpack.c.l.b16 %v450
        %v463 = vunpack.c.l.b16 %v451
        %v464 = vunpack.c.l.b16 %v452
        %v465 = vpack.c.b16 %v460, %v459
        %v466 = vpack.c.b16 %v462, %v461
        %v467 = vpack.c.b16 %v464, %v463
        %v487 = vunpack.c.l.b16 %v431
        %v488 = vunpack.c.l.b16 %v432
        %v489 = vunpack.c.l.b16 %v433
        %v490 = vunpack.c.l.b16 %v434
        %v491 = vunpack.c.l.b16 %v435
        %v492 = vunpack.c.l.b16 %v436
        %v493 = vunpack.c.l.b16 %v437
        %v494 = vunpack.c.l.b16 %v438
        %v495 = vunpack.c.l.b16 %v439
        %v496 = vunpack.c.l.b16 %v440
        %v497 = vunpack.c.l.b16 %v441
        %v498 = vunpack.c.l.b16 %v442
        %v499 = vunpack.c.l.b16 %v443
        %v500 = vunpack.c.l.b16 %v444
        %v501 = vunpack.c.l.b16 %v445
        %v502 = vunpack.c.l.b16 %v446
        %v503 = vpack.c.b16 %v488, %v487
        %v504 = vpack.c.b16 %v490, %v489
        %v505 = vpack.c.b16 %v492, %v491
        %v506 = vpack.c.b16 %v494, %v493
        %v507 = vpack.c.b16 %v496, %v495
        %v508 = vpack.c.b16 %v498, %v497
        %v509 = vpack.c.b16 %v500, %v499
        %v510 = vpack.c.b16 %v502, %v501
        %519 = vmatprep.subr.bf16.mxu0 0
        %520 = vmatpush1.bf16.msra.mxu0 %v503
        %521 = vmatprep.subr.bf16.mxu0 0
        %522 = vmatpush1.bf16.msra.mxu0 %v504
        %523 = vmatprep.subr.bf16.mxu0 0
        %524 = vmatpush1.bf16.msra.mxu0 %v505
        %525 = vmatprep.subr.bf16.mxu0 0
        %526 = vmatpush1.bf16.msra.mxu0 %v506
        %527 = vmatprep.subr.bf16.mxu0 0
        %528 = vmatpush1.bf16.msra.mxu0 %v507
        %529 = vmatprep.subr.bf16.mxu0 0
        %530 = vmatpush1.bf16.msra.mxu0 %v508
        %531 = vmatprep.subr.bf16.mxu0 0
        %532 = vmatpush1.bf16.msra.mxu0 %v509
        %533 = vmatprep.subr.bf16.mxu0 0
        %534 = vmatpush1.bf16.msra.mxu0 %v510
        %535 = vmatprep.subr.bf16.mxu0 0
        %536 = vmatpush1.bf16.msra.mxu0 0
        %537 = vmatprep.subr.bf16.mxu0 0
        %538 = vmatpush1.bf16.msra.mxu0 0
        %539 = vmatprep.subr.bf16.mxu0 0
        %540 = vmatpush1.bf16.msra.mxu0 0
        %541 = vmatprep.subr.bf16.mxu0 0
        %542 = vmatpush1.bf16.msra.mxu0 0
        %543 = vmatprep.subr.bf16.mxu0 0
        %544 = vmatpush1.bf16.msra.mxu0 0
        %545 = vmatprep.subr.bf16.mxu0 0
        %546 = vmatpush1.bf16.msra.mxu0 0
        %547 = vmatprep.subr.bf16.mxu0 0
        %548 = vmatpush1.bf16.msra.mxu0 0
        %549 = vmatprep.subr.bf16.mxu0 0
        %550 = vmatpush1.bf16.msra.mxu0 0
        %551 = vmatprep.mubr.bf16.mxu0 0
        %552 = vmatmul.mubr.bf16.gmra.mrb[0].mxu0 %v465
        %v553 = vpop.f32.mrb[0].mxu0
        %v554 = vadd.f32 0.0, %v553
        %v555 = vpop.f32.mrb[0].mxu0
        %v556 = vpop.f32.mrb[0].mxu0
        %v557 = vadd.f32 0.0, %v556
        %v558 = vpop.f32.mrb[0].mxu0
        %559 = vmatprep.mubr.bf16.mxu0 0
        %560 = vmatmul.mubr.bf16.gmra.mrb[0].mxu0 %v466
        %v561 = vpop.f32.mrb[0].mxu0
        %v562 = vadd.f32 0.0, %v561
        %v563 = vpop.f32.mrb[0].mxu0
        %v564 = vpop.f32.mrb[0].mxu0
        %v565 = vadd.f32 0.0, %v564
        %v566 = vpop.f32.mrb[0].mxu0
        %567 = vmatprep.mubr.bf16.mxu0 0
        %568 = vmatmul.mubr.bf16.gmra.mrb[0].mxu0 %v467
        %v569 = vpop.f32.mrb[0].mxu0
        %v570 = vadd.f32 0.0, %v569
        %v571 = vpop.f32.mrb[0].mxu0
        %v572 = vpop.f32.mrb[0].mxu0
        %v573 = vadd.f32 0.0, %v572
        %v574 = vpop.f32.mrb[0].mxu0
        %575 = vdwg.mxu0
        %s576 = scalar_lea.vmem %s400, 24 [#allocation2]
        %v577 = vld [vmem:[%s576] sm:$0xf]
        %v578 = vld [vmem:[%s576 + $0x4] sm:$0xf]
        %v579 = vld [vmem:[%s576 + $0x8] sm:$0xf]
        %v580 = vld [vmem:[%s576 + $0xc] sm:$0xf]
        %v581 = vld [vmem:[%s576 + $0x10] sm:$0xf]
        %v582 = vld [vmem:[%s576 + $0x14] sm:$0xf]
        %v589 = vunpack.c.l.b16 %v577
        %v590 = vunpack.c.l.b16 %v578
        %v591 = vunpack.c.l.b16 %v579
        %v592 = vunpack.c.l.b16 %v580
        %v593 = vunpack.c.l.b16 %v581
        %v594 = vunpack.c.l.b16 %v582
        %v595 = vpack.c.b16 %v590, %v589
        %v596 = vpack.c.b16 %v592, %v591
        %v597 = vpack.c.b16 %v594, %v593
        %601 = vmatprep.subr.bf16.mxu0 0
        %602 = vmatpush1.bf16.msra.mxu0 %v503
        %603 = vmatprep.subr.bf16.mxu0 0
        %604 = vmatpush1.bf16.msra.mxu0 %v504
        %605 = vmatprep.subr.bf16.mxu0 0
        %606 = vmatpush1.bf16.msra.mxu0 %v505
        %607 = vmatprep.subr.bf16.mxu0 0
        %608 = vmatpush1.bf16.msra.mxu0 %v506
        %609 = vmatprep.subr.bf16.mxu0 0
        %610 = vmatpush1.bf16.msra.mxu0 %v507
        %611 = vmatprep.subr.bf16.mxu0 0
        %612 = vmatpush1.bf16.msra.mxu0 %v508
        %613 = vmatprep.subr.bf16.mxu0 0
        %614 = vmatpush1.bf16.msra.mxu0 %v509
        %615 = vmatprep.subr.bf16.mxu0 0
        %616 = vmatpush1.bf16.msra.mxu0 %v510
        %617 = vmatprep.subr.bf16.mxu0 0
        %618 = vmatpush1.bf16.msra.mxu0 0
        %619 = vmatprep.subr.bf16.mxu0 0
        %620 = vmatpush1.bf16.msra.mxu0 0
        %621 = vmatprep.subr.bf16.mxu0 0
        %622 = vmatpush1.bf16.msra.mxu0 0
        %623 = vmatprep.subr.bf16.mxu0 0
        %624 = vmatpush1.bf16.msra.mxu0 0
        %625 = vmatprep.subr.bf16.mxu0 0
        %626 = vmatpush1.bf16.msra.mxu0 0
        %627 = vmatprep.subr.bf16.mxu0 0
        %628 = vmatpush1.bf16.msra.mxu0 0
        %629 = vmatprep.subr.bf16.mxu0 0
        %630 = vmatpush1.bf16.msra.mxu0 0
        %631 = vmatprep.subr.bf16.mxu0 0
        %632 = vmatpush1.bf16.msra.mxu0 0
        %633 = vmatprep.mubr.bf16.mxu0 0
        %634 = vmatmul.mubr.bf16.gmra.mrb[0].mxu0 %v595
        %v635 = vpop.f32.mrb[0].mxu0
        %v636 = vadd.f32 0.0, %v635
        %v637 = vpop.f32.mrb[0].mxu0
        %v638 = vpop.f32.mrb[0].mxu0
        %v639 = vadd.f32 0.0, %v638
        %v640 = vpop.f32.mrb[0].mxu0
        %641 = vmatprep.mubr.bf16.mxu0 0
        %642 = vmatmul.mubr.bf16.gmra.mrb[0].mxu0 %v596
        %v643 = vpop.f32.mrb[0].mxu0
        %v644 = vadd.f32 0.0, %v643
        %v645 = vpop.f32.mrb[0].mxu0
        %v646 = vpop.f32.mrb[0].mxu0
        %v647 = vadd.f32 0.0, %v646
        %v648 = vpop.f32.mrb[0].mxu0
        %649 = vmatprep.mubr.bf16.mxu0 0
        %650 = vmatmul.mubr.bf16.gmra.mrb[0].mxu0 %v597
        %v651 = vpop.f32.mrb[0].mxu0
        %v652 = vadd.f32 0.0, %v651
        %v653 = vpop.f32.mrb[0].mxu0
        %v654 = vpop.f32.mrb[0].mxu0
        %v655 = vadd.f32 0.0, %v654
        %v656 = vpop.f32.mrb[0].mxu0
        %657 = vdwg.mxu0
        %s658 = scalar_lea.vmem %s400, 48 [#allocation2]
        %v659 = vld [vmem:[%s658] sm:$0xf]
        %v660 = vld [vmem:[%s658 + $0x4] sm:$0xf]
        %v661 = vld [vmem:[%s658 + $0x8] sm:$0xf]
        %v662 = vld [vmem:[%s658 + $0xc] sm:$0xf]
        %v663 = vld [vmem:[%s658 + $0x10] sm:$0xf]
        %v664 = vld [vmem:[%s658 + $0x14] sm:$0xf]
        %v671 = vunpack.c.l.b16 %v659
        %v672 = vunpack.c.l.b16 %v660
        %v673 = vunpack.c.l.b16 %v661
        %v674 = vunpack.c.l.b16 %v662
        %v675 = vunpack.c.l.b16 %v663
        %v676 = vunpack.c.l.b16 %v664
        %v677 = vpack.c.b16 %v672, %v671
        %v678 = vpack.c.b16 %v674, %v673
        %v679 = vpack.c.b16 %v676, %v675
        %683 = vmatprep.subr.bf16.mxu0 0
        %684 = vmatpush1.bf16.msra.mxu0 %v503
        %685 = vmatprep.subr.bf16.mxu0 0
        %686 = vmatpush1.bf16.msra.mxu0 %v504
        %687 = vmatprep.subr.bf16.mxu0 0
        %688 = vmatpush1.bf16.msra.mxu0 %v505
        %689 = vmatprep.subr.bf16.mxu0 0
        %690 = vmatpush1.bf16.msra.mxu0 %v506
        %691 = vmatprep.subr.bf16.mxu0 0
        %692 = vmatpush1.bf16.msra.mxu0 %v507
        %693 = vmatprep.subr.bf16.mxu0 0
        %694 = vmatpush1.bf16.msra.mxu0 %v508
        %695 = vmatprep.subr.bf16.mxu0 0
        %696 = vmatpush1.bf16.msra.mxu0 %v509
        %697 = vmatprep.subr.bf16.mxu0 0
        %698 = vmatpush1.bf16.msra.mxu0 %v510
        %699 = vmatprep.subr.bf16.mxu0 0
        %700 = vmatpush1.bf16.msra.mxu0 0
        %701 = vmatprep.subr.bf16.mxu0 0
        %702 = vmatpush1.bf16.msra.mxu0 0
        %703 = vmatprep.subr.bf16.mxu0 0
        %704 = vmatpush1.bf16.msra.mxu0 0
        %705 = vmatprep.subr.bf16.mxu0 0
        %706 = vmatpush1.bf16.msra.mxu0 0
        %707 = vmatprep.subr.bf16.mxu0 0
        %708 = vmatpush1.bf16.msra.mxu0 0
        %709 = vmatprep.subr.bf16.mxu0 0
        %710 = vmatpush1.bf16.msra.mxu0 0
        %711 = vmatprep.subr.bf16.mxu0 0
        %712 = vmatpush1.bf16.msra.mxu0 0
        %713 = vmatprep.subr.bf16.mxu0 0
        %714 = vmatpush1.bf16.msra.mxu0 0
        %715 = vmatprep.mubr.bf16.mxu0 0
        %716 = vmatmul.mubr.bf16.gmra.mrb[0].mxu0 %v677
        %v717 = vpop.f32.mrb[0].mxu0
        %v718 = vadd.f32 0.0, %v717
        %v719 = vpop.f32.mrb[0].mxu0
        %v720 = vpop.f32.mrb[0].mxu0
        %v721 = vadd.f32 0.0, %v720
        %v722 = vpop.f32.mrb[0].mxu0
        %723 = vmatprep.mubr.bf16.mxu0 0
        %724 = vmatmul.mubr.bf16.gmra.mrb[0].mxu0 %v678
        %v725 = vpop.f32.mrb[0].mxu0
        %v726 = vadd.f32 0.0, %v725
        %v727 = vpop.f32.mrb[0].mxu0
        %v728 = vpop.f32.mrb[0].mxu0
        %v729 = vadd.f32 0.0, %v728
        %v730 = vpop.f32.mrb[0].mxu0
        %731 = vmatprep.mubr.bf16.mxu0 0
        %732 = vmatmul.mubr.bf16.gmra.mrb[0].mxu0 %v679
        %v733 = vpop.f32.mrb[0].mxu0
        %v734 = vadd.f32 0.0, %v733
        %v735 = vpop.f32.mrb[0].mxu0
        %v736 = vpop.f32.mrb[0].mxu0
        %v737 = vadd.f32 0.0, %v736
        %v738 = vpop.f32.mrb[0].mxu0
        %739 = vdwg.mxu0
        %s740 = scalar_lea.vmem %s400, 72 [#allocation2]
        %v741 = vld [vmem:[%s740] sm:$0xf]
        %v742 = vld [vmem:[%s740 + $0x4] sm:$0xf]
        %v743 = vld [vmem:[%s740 + $0x8] sm:$0xf]
        %v744 = vld [vmem:[%s740 + $0xc] sm:$0xf]
        %v745 = vld [vmem:[%s740 + $0x10] sm:$0xf]
        %v746 = vld [vmem:[%s740 + $0x14] sm:$0xf]
        %v753 = vunpack.c.l.b16 %v741
        %v754 = vunpack.c.l.b16 %v742
        %v755 = vunpack.c.l.b16 %v743
        %v756 = vunpack.c.l.b16 %v744
        %v757 = vunpack.c.l.b16 %v745
        %v758 = vunpack.c.l.b16 %v746
        %v759 = vpack.c.b16 %v754, %v753
        %v760 = vpack.c.b16 %v756, %v755
        %v761 = vpack.c.b16 %v758, %v757
        %765 = vmatprep.subr.bf16.mxu0 0
        %766 = vmatpush1.bf16.msra.mxu0 %v503
        %767 = vmatprep.subr.bf16.mxu0 0
        %768 = vmatpush1.bf16.msra.mxu0 %v504
        %769 = vmatprep.subr.bf16.mxu0 0
        %770 = vmatpush1.bf16.msra.mxu0 %v505
        %771 = vmatprep.subr.bf16.mxu0 0
        %772 = vmatpush1.bf16.msra.mxu0 %v506
        %773 = vmatprep.subr.bf16.mxu0 0
        %774 = vmatpush1.bf16.msra.mxu0 %v507
        %775 = vmatprep.subr.bf16.mxu0 0
        %776 = vmatpush1.bf16.msra.mxu0 %v508
        %777 = vmatprep.subr.bf16.mxu0 0
        %778 = vmatpush1.bf16.msra.mxu0 %v509
        %779 = vmatprep.subr.bf16.mxu0 0
        %780 = vmatpush1.bf16.msra.mxu0 %v510
        %781 = vmatprep.subr.bf16.mxu0 0
        %782 = vmatpush1.bf16.msra.mxu0 0
        %783 = vmatprep.subr.bf16.mxu0 0
        %784 = vmatpush1.bf16.msra.mxu0 0
        %785 = vmatprep.subr.bf16.mxu0 0
        %786 = vmatpush1.bf16.msra.mxu0 0
        %787 = vmatprep.subr.bf16.mxu0 0
        %788 = vmatpush1.bf16.msra.mxu0 0
        %789 = vmatprep.subr.bf16.mxu0 0
        %790 = vmatpush1.bf16.msra.mxu0 0
        %791 = vmatprep.subr.bf16.mxu0 0
        %792 = vmatpush1.bf16.msra.mxu0 0
        %793 = vmatprep.subr.bf16.mxu0 0
        %794 = vmatpush1.bf16.msra.mxu0 0
        %795 = vmatprep.subr.bf16.mxu0 0
        %796 = vmatpush1.bf16.msra.mxu0 0
        %797 = vmatprep.mubr.bf16.mxu0 0
        %798 = vmatmul.mubr.bf16.gmra.mrb[0].mxu0 %v759
        %v799 = vpop.f32.mrb[0].mxu0
        %v800 = vadd.f32 0.0, %v799
        %v801 = vpop.f32.mrb[0].mxu0
        %v802 = vpop.f32.mrb[0].mxu0
        %v803 = vadd.f32 0.0, %v802
        %v804 = vpop.f32.mrb[0].mxu0
        %805 = vmatprep.mubr.bf16.mxu0 0
        %806 = vmatmul.mubr.bf16.gmra.mrb[0].mxu0 %v760
        %v807 = vpop.f32.mrb[0].mxu0
        %v808 = vadd.f32 0.0, %v807
        %v809 = vpop.f32.mrb[0].mxu0
        %v810 = vpop.f32.mrb[0].mxu0
        %v811 = vadd.f32 0.0, %v810
        %v812 = vpop.f32.mrb[0].mxu0
        %813 = vmatprep.mubr.bf16.mxu0 0
        %814 = vmatmul.mubr.bf16.gmra.mrb[0].mxu0 %v761
        %v815 = vpop.f32.mrb[0].mxu0
        %v816 = vadd.f32 0.0, %v815
        %v817 = vpop.f32.mrb[0].mxu0
        %v818 = vpop.f32.mrb[0].mxu0
        %v819 = vadd.f32 0.0, %v818
        %v820 = vpop.f32.mrb[0].mxu0
        %821 = vdwg.mxu0
        %v822 = vmax.f32 %v554, %v636
        %v823 = vmax.f32 %v557, %v639
        %v824 = vmax.f32 %v562, %v644
        %v825 = vmax.f32 %v565, %v647
        %v826 = vmax.f32 %v570, %v652
        %v827 = vmax.f32 %v573, %v655
        %v828 = vmax.f32 %v718, %v800
        %v829 = vmax.f32 %v721, %v803
        %v830 = vmax.f32 %v726, %v808
        %v831 = vmax.f32 %v729, %v811
        %v832 = vmax.f32 %v734, %v816
        %v833 = vmax.f32 %v737, %v819
        %v834 = vmax.f32 %v822, %v828
        %v835 = vmax.f32 %v823, %v829
        %v836 = vmax.f32 %v824, %v830
        %v837 = vmax.f32 %v825, %v831
        %v838 = vmax.f32 %v826, %v832
        %v839 = vmax.f32 %v827, %v833
        %v840 = vld [vmem:[%s2] sm:$0x1]
        %v842 = vlaneseq
        %v843 = vshrl.u32 %v842, 7
        %v844 = vsub.s32 0, %v843
        %v845 = vrot.slane %v840, %v844
        %v847 = vadd.f32 %v834, %v845
        %v848 = vadd.f32 %v835, %v845
        %v849 = vadd.f32 %v836, %v845
        %v850 = vadd.f32 %v837, %v845
        %v851 = vadd.f32 %v838, %v845
        %v852 = vadd.f32 %v839, %v845
        %v853 = vmax.f32 %v847, 0.0
        %v854 = vmax.f32 %v848, 0.0
        %v855 = vmax.f32 %v849, 0.0
        %v856 = vmax.f32 %v850, 0.0
        %v857 = vmax.f32 %v851, 0.0
        %v858 = vmax.f32 %v852, 0.0
        %859 = vst [vmem:[%s419] sm:$0xff] %v853
        %860 = vst [vmem:[%s419 + $0x8] sm:$0xff] %v854
        %861 = vst [vmem:[%s419 + $0x10] sm:$0xff] %v855
        %862 = vst [vmem:[%s419 + $0x18] sm:$0xff] %v856
        %863 = vst [vmem:[%s419 + $0x20] sm:$0xff] %v857
        %864 = vst [vmem:[%s419 + $0x28] sm:$0xff] %v858
        %s865 = sand.u32 %s90, 1
        %s866 = sand.u32 %s90, 1
        %s867 = smul.addr %s866, 48
        %s868 = scalar_lea.vmem [#allocation3], %s867
        // Predicated region
        $region95: #{flower_cnn_forward.2} parent=89 // pred_check
          %p869 = pneg %p100
        $region96: #{flower_cnn_forward.2} parent=89 // pred_check_branch
          %871 = sbr.rel (%p869) target = $region98
        $region97: #{flower_cnn_forward.2} parent=89 // pred_region
          %s872 = smul.u32 6, %s14
          %s873 = ssub.s32 9, %s872
          %p874 = scmp.lt.s32.totalorder %s873, 6
          %s875 = scalar_select %p874, %s873, 6
          %s876 = smul.u32 128, %s875
          %p877 = scmp.ne.s32.totalorder 0, %s876
          %s878 = smul.addr %s872, 8
          %s879 = scalar_lea.vmem %s3, %s878
          // Predicated region
          $region99: #{flower_cnn_forward.2} parent=97 // pred_check
            %p880 = pneg %p877
          $region100: #{flower_cnn_forward.2} parent=97 // pred_check_branch
            %882 = sbr.rel (%p880) target = $region102
          $region101: #{flower_cnn_forward.2} parent=97 // pred_region
            // Predicated region
            $region103: #{flower_cnn_forward.2} parent=101 // pred_check
              _
            $region104: #{flower_cnn_forward.2} parent=101 // pred_check_branch
              %884 = sbr.rel (0) target = $region106
            $region105: #{flower_cnn_forward.2} parent=101 // pred_region
              // Predicated region
              $region125: #{flower_cnn_forward.2} parent=105 // pred_check
                _
              $region126: #{flower_cnn_forward.2} parent=105 // pred_check_branch
                %944 = sbr.rel (0) target = $region128
              $region127: #{flower_cnn_forward.2} parent=105 // pred_region
                %s945 = sdiv.u32.pop %s875, 6
                %s946 = srem.u32.pop %s875, 6
                // While loop
                $region129: #{flower_cnn_forward.2} parent=127 // loop_pre_header
                  _
                $region130: #{flower_cnn_forward.2} parent=127 // loop_header
                  %s948 = sphi 0, %s950
                  %p949 = scmp.ge.s32.totalorder %s948, %s945
                  %s953 = sphi 0, %s970
                  %s954 = sphi %s868, %s973
                  %s955 = sphi %s879, %s974
                $region131: #{flower_cnn_forward.2} parent=127 // loop_header_branch
                  %952 = sbr.rel (%p949) target = $region135
                $region132: #{flower_cnn_forward.2} parent=127 // loop_body
                  %v956 = vld [vmem:[%s954] sm:$0xff]
                  %957 = vst [vmem:[%s955] sm:$0xff] %v956
                  %v958 = vld [vmem:[%s954 + $0x8] sm:$0xff]
                  %959 = vst [vmem:[%s955 + $0x8] sm:$0xff] %v958
                  %v960 = vld [vmem:[%s954 + $0x10] sm:$0xff]
                  %961 = vst [vmem:[%s955 + $0x10] sm:$0xff] %v960
                  %v962 = vld [vmem:[%s954 + $0x18] sm:$0xff]
                  %963 = vst [vmem:[%s955 + $0x18] sm:$0xff] %v962
                  %v964 = vld [vmem:[%s954 + $0x20] sm:$0xff]
                  %965 = vst [vmem:[%s955 + $0x20] sm:$0xff] %v964
                  %v966 = vld [vmem:[%s954 + $0x28] sm:$0xff]
                  %967 = vst [vmem:[%s955 + $0x28] sm:$0xff] %v966
                  %s968 = sadd.s32 1, %s953
                  %p969 = scmp.ge.s32.totalorder %s968, %s945
                  %s970 = scalar_select %p969, 0, %s968
                  %s971 = smul.u32 %s970, 48
                  %s972 = smul.u32 %s970, 48
                  %s973 = scalar_lea.vmem %s868, %s971 [#allocation3]
                  %s974 = scalar_lea.vmem %s879, %s972
                $region133: #{flower_cnn_forward.2} parent=127 // loop_footer
                  %s950 = sadd.s32 %s948, 1
                $region134: #{flower_cnn_forward.2} parent=127 // loop_footer_branch
                  %947 = sbr.rel target = $region130
                $region135: #{flower_cnn_forward.2} parent=127 // loop_exit
                  _
                %s975 = sdiv.u32.pop %s875, 6
                %s976 = srem.u32.pop %s875, 6
                %s977 = smul.u32 %s975, 6
                %s978 = smul.u32 8, %s977
                %s979 = scalar_lea.vmem %s868, %s978 [#allocation3]
                %s980 = smul.u32 8, %s977
                %s981 = scalar_lea.vmem %s879, %s980
                // While loop
                $region136: #{flower_cnn_forward.2} parent=127 // loop_pre_header
                  _
                $region137: #{flower_cnn_forward.2} parent=127 // loop_header
                  %s983 = sphi 0, %s985
                  %p984 = scmp.ge.s32.totalorder %s983, %s976
                  %s988 = sphi 0, %s995
                  %s989 = sphi %s979, %s998
                  %s990 = sphi %s981, %s999
                $region138: #{flower_cnn_forward.2} parent=127 // loop_header_branch
                  %987 = sbr.rel (%p984) target = $region142
                $region139: #{flower_cnn_forward.2} parent=127 // loop_body
                  %v991 = vld [vmem:[%s989] sm:$0xff]
                  %992 = vst [vmem:[%s990] sm:$0xff] %v991
                  %s993 = sadd.s32 1, %s988
                  %p994 = scmp.ge.s32.totalorder %s993, %s976
                  %s995 = scalar_select %p994, 0, %s993
                  %s996 = smul.u32 %s995, 8
                  %s997 = smul.u32 %s995, 8
                  %s998 = scalar_lea.vmem %s979, %s996 [#allocation3]
                  %s999 = scalar_lea.vmem %s981, %s997
                $region140: #{flower_cnn_forward.2} parent=127 // loop_footer
                  %s985 = sadd.s32 %s983, 1
                $region141: #{flower_cnn_forward.2} parent=127 // loop_footer_branch
                  %982 = sbr.rel target = $region137
                $region142: #{flower_cnn_forward.2} parent=127 // loop_exit
                  _
              $region128: #{flower_cnn_forward.2} parent=105 // pred_fallthru
                _
              // Predicated region
              $region143: #{flower_cnn_forward.2} parent=105 // pred_check
                _
              $region144: #{flower_cnn_forward.2} parent=105 // pred_check_branch
                %1001 = sbr.rel target = $region146
              $region145: #{flower_cnn_forward.2} parent=105 // pred_region
                _
              $region146: #{flower_cnn_forward.2} parent=105 // pred_fallthru
                _
            $region106: #{flower_cnn_forward.2} parent=101 // pred_fallthru
              _
            // Predicated region
            $region107: #{flower_cnn_forward.2} parent=101 // pred_check
              _
            $region108: #{flower_cnn_forward.2} parent=101 // pred_check_branch
              %886 = sbr.rel target = $region110
            $region109: #{flower_cnn_forward.2} parent=101 // pred_region
              %s888 = sdiv.u32.pop %s875, 6
              %s889 = srem.u32.pop %s875, 6
              // While loop
              $region111: #{flower_cnn_forward.2} parent=109 // loop_pre_header
                _
              $region112: #{flower_cnn_forward.2} parent=109 // loop_header
                %s891 = sphi 0, %s893
                %p892 = scmp.ge.s32.totalorder %s891, %s888
                %s896 = sphi 0, %s913
                %s897 = sphi %s868, %s916
                %s898 = sphi %s879, %s917
              $region113: #{flower_cnn_forward.2} parent=109 // loop_header_branch
                %895 = sbr.rel (%p892) target = $region117
              $region114: #{flower_cnn_forward.2} parent=109 // loop_body
                %v899 = vld [vmem:[%s897] sm:$0xff]
                %900 = vst [vmem:[%s898] sm:$0xff] %v899
                %v901 = vld [vmem:[%s897 + $0x8] sm:$0xff]
                %902 = vst [vmem:[%s898 + $0x8] sm:$0xff] %v901
                %v903 = vld [vmem:[%s897 + $0x10] sm:$0xff]
                %904 = vst [vmem:[%s898 + $0x10] sm:$0xff] %v903
                %v905 = vld [vmem:[%s897 + $0x18] sm:$0xff]
                %906 = vst [vmem:[%s898 + $0x18] sm:$0xff] %v905
                %v907 = vld [vmem:[%s897 + $0x20] sm:$0xff]
                %908 = vst [vmem:[%s898 + $0x20] sm:$0xff] %v907
                %v909 = vld [vmem:[%s897 + $0x28] sm:$0xff]
                %910 = vst [vmem:[%s898 + $0x28] sm:$0xff] %v909
                %s911 = sadd.s32 1, %s896
                %p912 = scmp.ge.s32.totalorder %s911, %s888
                %s913 = scalar_select %p912, 0, %s911
                %s914 = smul.u32 %s913, 48
                %s915 = smul.u32 %s913, 48
                %s916 = scalar_lea.vmem %s868, %s914 [#allocation3]
                %s917 = scalar_lea.vmem %s879, %s915
              $region115: #{flower_cnn_forward.2} parent=109 // loop_footer
                %s893 = sadd.s32 %s891, 1
              $region116: #{flower_cnn_forward.2} parent=109 // loop_footer_branch
                %890 = sbr.rel target = $region112
              $region117: #{flower_cnn_forward.2} parent=109 // loop_exit
                _
              %s918 = sdiv.u32.pop %s875, 6
              %s919 = srem.u32.pop %s875, 6
              %s920 = smul.u32 %s918, 6
              %s921 = smul.u32 8, %s920
              %s922 = scalar_lea.vmem %s868, %s921 [#allocation3]
              %s923 = smul.u32 8, %s920
              %s924 = scalar_lea.vmem %s879, %s923
              // While loop
              $region118: #{flower_cnn_forward.2} parent=109 // loop_pre_header
                _
              $region119: #{flower_cnn_forward.2} parent=109 // loop_header
                %s926 = sphi 0, %s928
                %p927 = scmp.ge.s32.totalorder %s926, %s919
                %s931 = sphi 0, %s938
                %s932 = sphi %s922, %s941
                %s933 = sphi %s924, %s942
              $region120: #{flower_cnn_forward.2} parent=109 // loop_header_branch
                %930 = sbr.rel (%p927) target = $region124
              $region121: #{flower_cnn_forward.2} parent=109 // loop_body
                %v934 = vld [vmem:[%s932] sm:$0xff]
                %935 = vst [vmem:[%s933] sm:$0xff] %v934
                %s936 = sadd.s32 1, %s931
                %p937 = scmp.ge.s32.totalorder %s936, %s919
                %s938 = scalar_select %p937, 0, %s936
                %s939 = smul.u32 %s938, 8
                %s940 = smul.u32 %s938, 8
                %s941 = scalar_lea.vmem %s922, %s939 [#allocation3]
                %s942 = scalar_lea.vmem %s924, %s940
              $region122: #{flower_cnn_forward.2} parent=109 // loop_footer
                %s928 = sadd.s32 %s926, 1
              $region123: #{flower_cnn_forward.2} parent=109 // loop_footer_branch
                %925 = sbr.rel target = $region119
              $region124: #{flower_cnn_forward.2} parent=109 // loop_exit
                _
            $region110: #{flower_cnn_forward.2} parent=101 // pred_fallthru
              _
          $region102: #{flower_cnn_forward.2} parent=97 // pred_fallthru
            _
          %1002 = vnop
        $region98: #{flower_cnn_forward.2} parent=89 // pred_fallthru
          _
      $region90: #{flower_cnn_forward.2} parent=5 // pred_fallthru
        _
      %p1003 = scmp.le.s32.totalorder 2, %s9
      // Predicated region
      $region147: #{flower_cnn_forward.2} parent=5 // pred_check
        %p1004 = pneg %p1003
      $region148: #{flower_cnn_forward.2} parent=5 // pred_check_branch
        %1006 = sbr.rel (%p1004) target = $region150
      $region149: #{flower_cnn_forward.2} parent=5 // pred_region
        %s1007 = ssub.s32 %s9, 2
        // Predicated region
        $region151: #{flower_cnn_forward.2} parent=149 // pred_check
          %p1008 = pneg %p106
        $region152: #{flower_cnn_forward.2} parent=149 // pred_check_branch
          %1010 = sbr.rel (%p1008) target = $region154
        $region153: #{flower_cnn_forward.2} parent=149 // pred_region
          %s1011 = sand.u32 %s91, 1
          %s1012 = sand.u32 %s91, 1
          %s1013 = smul.addr %s1012, 48
          %s1014 = scalar_lea.vmem [#allocation3], %s1013
        $region154: #{flower_cnn_forward.2} parent=149 // pred_fallthru
          _
      $region150: #{flower_cnn_forward.2} parent=5 // pred_fallthru
        _
    $region6: #{flower_cnn_forward.2} parent=1 // loop_footer
      %s13 = sadd.s32 1, %s9
    $region7: #{flower_cnn_forward.2} parent=1 // loop_footer_branch
      %8 = sbr.rel target = $region3
    $region8: #{flower_cnn_forward.2} parent=1 // loop_exit
      _

// kernel: flower_cnn_forward.3
$region0: #{flower_cnn_forward.3}
  #allocation0 [shape = 'u32[]', space=smem, size = 0x4, offset = 0x4, fixed_abs, tag = 'smem constant byte address 0x4 - core index']
  #allocation1 [shape = 'u32[144,128]{1,0:T(1,128)}', space=vmem, size = 0x12000, scoped, tag = 'internal scratch']
  %s0 = inlined_call_operand.vmem [shape: bf16[4,2,896], index: 0, kind: input, shape index: {}]
  %s1 = inlined_call_operand.vmem [shape: bf16[896,128], index: 1, kind: input, shape index: {}]
  %s2 = inlined_call_operand.vmem [shape: f32[1,128], index: 2, kind: input, shape index: {}]
  %s3 = inlined_call_operand.vmem [shape: bf16[128,128], index: 3, kind: input, shape index: {}]
  %s4 = inlined_call_operand.vmem [shape: f32[1,128], index: 4, kind: input, shape index: {}]
  %s5 = inlined_call_operand.vmem [shape: bf16[128,128], index: 5, kind: input, shape index: {}]
  %s6 = inlined_call_operand.vmem [shape: f32[1,128], index: 6, kind: input, shape index: {}]
  %s7 = inlined_call_operand.hbm [shape: f32[2,128], index: 7, kind: output, shape index: {}]
  %s8 = sld [smem:[#allocation0]]
  $region38: #{flower_cnn_forward.3} parent=0
    _
  %s10 = ssub.s32 1, %s8
  %s11 = scalar_select 0, %s10, %s8
  $region1: #{flower_cnn_forward.3} parent=0
    #allocation2 [shape = 'u8[1024]{0}', space=vmem, size = 0x400, scoped, tag = 'output window, operand 0, single buffered']
    #allocation3 [shape = 's32[1]{0}', space=sflag, size = 0x4, scoped, tag = 'scoped memory for flower_cnn_forward.3']
    %12 = vsyncpa [#allocation3], 0
    // Predicated region
    $region2: #{flower_cnn_forward.3} parent=1 // pred_check
      _
    $region3: #{flower_cnn_forward.3} parent=1 // pred_check_branch
      %14 = sbr.rel (0) target = $region5
    $region4: #{flower_cnn_forward.3} parent=1 // pred_region
      _
    $region5: #{flower_cnn_forward.3} parent=1 // pred_fallthru
      _
    // Predicated region
    $region6: #{flower_cnn_forward.3} parent=1 // pred_check
      _
    $region7: #{flower_cnn_forward.3} parent=1 // pred_check_branch
      %16 = sbr.rel (0) target = $region9
    $region8: #{flower_cnn_forward.3} parent=1 // pred_region
      _
    $region9: #{flower_cnn_forward.3} parent=1 // pred_fallthru
      _
    // Predicated region
    $region10: #{flower_cnn_forward.3} parent=1 // pred_check
      _
    $region11: #{flower_cnn_forward.3} parent=1 // pred_check_branch
      %18 = sbr.rel (0) target = $region13
    $region12: #{flower_cnn_forward.3} parent=1 // pred_region
      _
    $region13: #{flower_cnn_forward.3} parent=1 // pred_fallthru
      _
    // Predicated region
    $region14: #{flower_cnn_forward.3} parent=1 // pred_check
      _
    $region15: #{flower_cnn_forward.3} parent=1 // pred_check_branch
      %20 = sbr.rel (0) target = $region17
    $region16: #{flower_cnn_forward.3} parent=1 // pred_region
      _
    $region17: #{flower_cnn_forward.3} parent=1 // pred_fallthru
      _
    // Predicated region
    $region18: #{flower_cnn_forward.3} parent=1 // pred_check
      _
    $region19: #{flower_cnn_forward.3} parent=1 // pred_check_branch
      %22 = sbr.rel (0) target = $region21
    $region20: #{flower_cnn_forward.3} parent=1 // pred_region
      _
    $region21: #{flower_cnn_forward.3} parent=1 // pred_fallthru
      _
    // Predicated region
    $region22: #{flower_cnn_forward.3} parent=1 // pred_check
      _
    $region23: #{flower_cnn_forward.3} parent=1 // pred_check_branch
      %24 = sbr.rel (0) target = $region25
    $region24: #{flower_cnn_forward.3} parent=1 // pred_region
      _
    $region25: #{flower_cnn_forward.3} parent=1 // pred_fallthru
      _
    // Predicated region
    $region26: #{flower_cnn_forward.3} parent=1 // pred_check
      _
    $region27: #{flower_cnn_forward.3} parent=1 // pred_check_branch
      %26 = sbr.rel (0) target = $region29
    $region28: #{flower_cnn_forward.3} parent=1 // pred_region
      _
    $region29: #{flower_cnn_forward.3} parent=1 // pred_fallthru
      _
    %v28 = vld [vmem:[%s1] sm:$0xf]
    %v29 = vld [vmem:[%s1 + $0x4] sm:$0xf]
    %v30 = vld [vmem:[%s1 + $0x8] sm:$0xf]
    %v31 = vld [vmem:[%s1 + $0xc] sm:$0xf]
    %v32 = vld [vmem:[%s1 + $0x10] sm:$0xf]
    %v33 = vld [vmem:[%s1 + $0x14] sm:$0xf]
    %v34 = vld [vmem:[%s1 + $0x18] sm:$0xf]
    %v35 = vld [vmem:[%s1 + $0x1c] sm:$0xf]
    %v36 = vld [vmem:[%s1 + $0x20] sm:$0xf]
    %v37 = vld [vmem:[%s1 + $0x24] sm:$0xf]
    %v38 = vld [vmem:[%s1 + $0x28] sm:$0xf]
    %v39 = vld [vmem:[%s1 + $0x2c] sm:$0xf]
    %v40 = vld [vmem:[%s1 + $0x30] sm:$0xf]
    %v41 = vld [vmem:[%s1 + $0x34] sm:$0xf]
    %v42 = vld [vmem:[%s1 + $0x38] sm:$0xf]
    %v43 = vld [vmem:[%s1 + $0x3c] sm:$0xf]
    %v44 = vld [vmem:[%s1 + $0x40] sm:$0xf]
    %v45 = vld [vmem:[%s1 + $0x44] sm:$0xf]
    %v46 = vld [vmem:[%s1 + $0x48] sm:$0xf]
    %v47 = vld [vmem:[%s1 + $0x4c] sm:$0xf]
    %v48 = vld [vmem:[%s1 + $0x50] sm:$0xf]
    %v49 = vld [vmem:[%s1 + $0x54] sm:$0xf]
    %v50 = vld [vmem:[%s1 + $0x58] sm:$0xf]
    %v51 = vld [vmem:[%s1 + $0x5c] sm:$0xf]
    %v52 = vld [vmem:[%s1 + $0x60] sm:$0xf]
    %v53 = vld [vmem:[%s1 + $0x64] sm:$0xf]
    %v54 = vld [vmem:[%s1 + $0x68] sm:$0xf]
    %v55 = vld [vmem:[%s1 + $0x6c] sm:$0xf]
    %v56 = vld [vmem:[%s1 + $0x70] sm:$0xf]
    %v57 = vld [vmem:[%s1 + $0x74] sm:$0xf]
    %v58 = vld [vmem:[%s1 + $0x78] sm:$0xf]
    %v59 = vld [vmem:[%s1 + $0x7c] sm:$0xf]
    %v60 = vld [vmem:[%s1 + $0x80] sm:$0xf]
    %v61 = vld [vmem:[%s1 + $0x84] sm:$0xf]
    %v62 = vld [vmem:[%s1 + $0x88] sm:$0xf]
    %v63 = vld [vmem:[%s1 + $0x8c] sm:$0xf]
    %v64 = vld [vmem:[%s1 + $0x90] sm:$0xf]
    %v65 = vld [vmem:[%s1 + $0x94] sm:$0xf]
    %v66 = vld [vmem:[%s1 + $0x98] sm:$0xf]
    %v67 = vld [vmem:[%s1 + $0x9c] sm:$0xf]
    %v68 = vld [vmem:[%s1 + $0xa0] sm:$0xf]
    %v69 = vld [vmem:[%s1 + $0xa4] sm:$0xf]
    %v70 = vld [vmem:[%s1 + $0xa8] sm:$0xf]
    %v71 = vld [vmem:[%s1 + $0xac] sm:$0xf]
    %v72 = vld [vmem:[%s1 + $0xb0] sm:$0xf]
    %v73 = vld [vmem:[%s1 + $0xb4] sm:$0xf]
    %v74 = vld [vmem:[%s1 + $0xb8] sm:$0xf]
    %v75 = vld [vmem:[%s1 + $0xbc] sm:$0xf]
    %v76 = vld [vmem:[%s1 + $0xc0] sm:$0xf]
    %v77 = vld [vmem:[%s1 + $0xc4] sm:$0xf]
    %v78 = vld [vmem:[%s1 + $0xc8] sm:$0xf]
    %v79 = vld [vmem:[%s1 + $0xcc] sm:$0xf]
    %v80 = vld [vmem:[%s1 + $0xd0] sm:$0xf]
    %v81 = vld [vmem:[%s1 + $0xd4] sm:$0xf]
    %v82 = vld [vmem:[%s1 + $0xd8] sm:$0xf]
    %v83 = vld [vmem:[%s1 + $0xdc] sm:$0xf]
    %v84 = vld [vmem:[%s1 + $0xe0] sm:$0xf]
    %v85 = vld [vmem:[%s1 + $0xe4] sm:$0xf]
    %v86 = vld [vmem:[%s1 + $0xe8] sm:$0xf]
    %v87 = vld [vmem:[%s1 + $0xec] sm:$0xf]
    %v88 = vld [vmem:[%s1 + $0xf0] sm:$0xf]
    %v89 = vld [vmem:[%s1 + $0xf4] sm:$0xf]
    %v90 = vld [vmem:[%s1 + $0xf8] sm:$0xf]
    %v91 = vld [vmem:[%s1 + $0xfc] sm:$0xf]
    %v92 = vld [vmem:[%s1 + $0x100] sm:$0xf]
    %v93 = vld [vmem:[%s1 + $0x104] sm:$0xf]
    %v94 = vld [vmem:[%s1 + $0x108] sm:$0xf]
    %v95 = vld [vmem:[%s1 + $0x10c] sm:$0xf]
    %v96 = vld [vmem:[%s1 + $0x110] sm:$0xf]
    %v97 = vld [vmem:[%s1 + $0x114] sm:$0xf]
    %v98 = vld [vmem:[%s1 + $0x118] sm:$0xf]
    %v99 = vld [vmem:[%s1 + $0x11c] sm:$0xf]
    %v100 = vld [vmem:[%s1 + $0x120] sm:$0xf]
    %v101 = vld [vmem:[%s1 + $0x124] sm:$0xf]
    %v102 = vld [vmem:[%s1 + $0x128] sm:$0xf]
    %v103 = vld [vmem:[%s1 + $0x12c] sm:$0xf]
    %v104 = vld [vmem:[%s1 + $0x130] sm:$0xf]
    %v105 = vld [vmem:[%s1 + $0x134] sm:$0xf]
    %v106 = vld [vmem:[%s1 + $0x138] sm:$0xf]
    %v107 = vld [vmem:[%s1 + $0x13c] sm:$0xf]
    %v108 = vld [vmem:[%s1 + $0x140] sm:$0xf]
    %v109 = vld [vmem:[%s1 + $0x144] sm:$0xf]
    %v110 = vld [vmem:[%s1 + $0x148] sm:$0xf]
    %v111 = vld [vmem:[%s1 + $0x14c] sm:$0xf]
    %v112 = vld [vmem:[%s1 + $0x150] sm:$0xf]
    %v113 = vld [vmem:[%s1 + $0x154] sm:$0xf]
    %v114 = vld [vmem:[%s1 + $0x158] sm:$0xf]
    %v115 = vld [vmem:[%s1 + $0x15c] sm:$0xf]
    %v116 = vld [vmem:[%s1 + $0x160] sm:$0xf]
    %v117 = vld [vmem:[%s1 + $0x164] sm:$0xf]
    %v118 = vld [vmem:[%s1 + $0x168] sm:$0xf]
    %v119 = vld [vmem:[%s1 + $0x16c] sm:$0xf]
    %v120 = vld [vmem:[%s1 + $0x170] sm:$0xf]
    %v121 = vld [vmem:[%s1 + $0x174] sm:$0xf]
    %v122 = vld [vmem:[%s1 + $0x178] sm:$0xf]
    %v123 = vld [vmem:[%s1 + $0x17c] sm:$0xf]
    %v124 = vld [vmem:[%s1 + $0x180] sm:$0xf]
    %v125 = vld [vmem:[%s1 + $0x184] sm:$0xf]
    %v126 = vld [vmem:[%s1 + $0x188] sm:$0xf]
    %v127 = vld [vmem:[%s1 + $0x18c] sm:$0xf]
    %v128 = vld [vmem:[%s1 + $0x190] sm:$0xf]
    %v129 = vld [vmem:[%s1 + $0x194] sm:$0xf]
    %v130 = vld [vmem:[%s1 + $0x198] sm:$0xf]
    %v131 = vld [vmem:[%s1 + $0x19c] sm:$0xf]
    %v132 = vld [vmem:[%s1 + $0x1a0] sm:$0xf]
    %v133 = vld [vmem:[%s1 + $0x1a4] sm:$0xf]
    %v134 = vld [vmem:[%s1 + $0x1a8] sm:$0xf]
    %v135 = vld [vmem:[%s1 + $0x1ac] sm:$0xf]
    %v136 = vld [vmem:[%s1 + $0x1b0] sm:$0xf]
    %v137 = vld [vmem:[%s1 + $0x1b4] sm:$0xf]
    %v138 = vld [vmem:[%s1 + $0x1b8] sm:$0xf]
    %v139 = vld [vmem:[%s1 + $0x1bc] sm:$0xf]
    %v140 = vld [vmem:[%s0] sm:$0x7f]
    %v142 = vcombine.high %v140, %v140
    %v144 = vunpack.c.l.s4 1966171168
    %v145 = vunpack.c.0.s8 %v144
    %v146 = vlaneseq
    %v147 = vshrl.u32 %v146, 7
    %v148 = vsub.s32 %v145, %v147
    %v149 = vrot.slane %v140, %v148
    %v151 = vunpack.c.l.s4 1966171168
    %v152 = vunpack.c.0.s8 %v151
    %v153 = vlaneseq
    %v154 = vshrl.u32 %v153, 7
    %v155 = vsub.s32 %v152, %v154
    %v156 = vrot.slane %v142, %v155
    %v157 = vcombine.high %v149, %v149
    %v158 = vcombine.high %v156, %v156
    %v160 = vunpack.c.l.s4 1966171168
    %v161 = vunpack.c.0.s8 %v160
    %v162 = vlaneseq
    %v163 = vshrl.u32 %v162, 7
    %v164 = vsub.s32 %v161, %v163
    %v165 = vrot.slane %v149, %v164
    %v167 = vunpack.c.l.s4 1966171168
    %v168 = vunpack.c.0.s8 %v167
    %v169 = vlaneseq
    %v170 = vshrl.u32 %v169, 7
    %v171 = vsub.s32 %v168, %v170
    %v172 = vrot.slane %v156, %v171
    %v174 = vunpack.c.l.s4 1966171168
    %v175 = vunpack.c.0.s8 %v174
    %v176 = vlaneseq
    %v177 = vshrl.u32 %v176, 7
    %v178 = vsub.s32 %v175, %v177
    %v179 = vrot.slane %v157, %v178
    %v181 = vunpack.c.l.s4 1966171168
    %v182 = vunpack.c.0.s8 %v181
    %v183 = vlaneseq
    %v184 = vshrl.u32 %v183, 7
    %v185 = vsub.s32 %v182, %v184
    %v186 = vrot.slane %v158, %v185
    %v187 = vcombine.high %v165, %v165
    %v188 = vcombine.high %v172, %v172
    %v189 = vcombine.high %v179, %v179
    %v309 = vunpack.c.l.b16 %v28
    %v310 = vunpack.c.l.b16 %v29
    %v311 = vunpack.c.l.b16 %v30
    %v312 = vunpack.c.l.b16 %v31
    %v313 = vunpack.c.l.b16 %v32
    %v314 = vunpack.c.l.b16 %v33
    %v315 = vunpack.c.l.b16 %v34
    %v316 = vunpack.c.l.b16 %v35
    %v317 = vunpack.c.l.b16 %v36
    %v318 = vunpack.c.l.b16 %v37
    %v319 = vunpack.c.l.b16 %v38
    %v320 = vunpack.c.l.b16 %v39
    %v321 = vunpack.c.l.b16 %v40
    %v322 = vunpack.c.l.b16 %v41
    %v323 = vunpack.c.l.b16 %v42
    %v324 = vunpack.c.l.b16 %v43
    %v325 = vunpack.c.l.b16 %v44
    %v326 = vunpack.c.l.b16 %v45
    %v327 = vunpack.c.l.b16 %v46
    %v328 = vunpack.c.l.b16 %v47
    %v329 = vunpack.c.l.b16 %v48
    %v330 = vunpack.c.l.b16 %v49
    %v331 = vunpack.c.l.b16 %v50
    %v332 = vunpack.c.l.b16 %v51
    %v333 = vunpack.c.l.b16 %v52
    %v334 = vunpack.c.l.b16 %v53
    %v335 = vunpack.c.l.b16 %v54
    %v336 = vunpack.c.l.b16 %v55
    %v337 = vunpack.c.l.b16 %v56
    %v338 = vunpack.c.l.b16 %v57
    %v339 = vunpack.c.l.b16 %v58
    %v340 = vunpack.c.l.b16 %v59
    %v341 = vunpack.c.l.b16 %v60
    %v342 = vunpack.c.l.b16 %v61
    %v343 = vunpack.c.l.b16 %v62
    %v344 = vunpack.c.l.b16 %v63
    %v345 = vunpack.c.l.b16 %v64
    %v346 = vunpack.c.l.b16 %v65
    %v347 = vunpack.c.l.b16 %v66
    %v348 = vunpack.c.l.b16 %v67
    %v349 = vunpack.c.l.b16 %v68
    %v350 = vunpack.c.l.b16 %v69
    %v351 = vunpack.c.l.b16 %v70
    %v352 = vunpack.c.l.b16 %v71
    %v353 = vunpack.c.l.b16 %v72
    %v354 = vunpack.c.l.b16 %v73
    %v355 = vunpack.c.l.b16 %v74
    %v356 = vunpack.c.l.b16 %v75
    %v357 = vunpack.c.l.b16 %v76
    %v358 = vunpack.c.l.b16 %v77
    %v359 = vunpack.c.l.b16 %v78
    %v360 = vunpack.c.l.b16 %v79
    %v361 = vunpack.c.l.b16 %v80
    %v362 = vunpack.c.l.b16 %v81
    %v363 = vunpack.c.l.b16 %v82
    %v364 = vunpack.c.l.b16 %v83
    %v365 = vunpack.c.l.b16 %v84
    %v366 = vunpack.c.l.b16 %v85
    %v367 = vunpack.c.l.b16 %v86
    %v368 = vunpack.c.l.b16 %v87
    %v369 = vunpack.c.l.b16 %v88
    %v370 = vunpack.c.l.b16 %v89
    %v371 = vunpack.c.l.b16 %v90
    %v372 = vunpack.c.l.b16 %v91
    %v373 = vunpack.c.l.b16 %v92
    %v374 = vunpack.c.l.b16 %v93
    %v375 = vunpack.c.l.b16 %v94
    %v376 = vunpack.c.l.b16 %v95
    %v377 = vunpack.c.l.b16 %v96
    %v378 = vunpack.c.l.b16 %v97
    %v379 = vunpack.c.l.b16 %v98
    %v380 = vunpack.c.l.b16 %v99
    %v381 = vunpack.c.l.b16 %v100
    %v382 = vunpack.c.l.b16 %v101
    %v383 = vunpack.c.l.b16 %v102
    %v384 = vunpack.c.l.b16 %v103
    %v385 = vunpack.c.l.b16 %v104
    %v386 = vunpack.c.l.b16 %v105
    %v387 = vunpack.c.l.b16 %v106
    %v388 = vunpack.c.l.b16 %v107
    %v389 = vunpack.c.l.b16 %v108
    %v390 = vunpack.c.l.b16 %v109
    %v391 = vunpack.c.l.b16 %v110
    %v392 = vunpack.c.l.b16 %v111
    %v393 = vunpack.c.l.b16 %v112
    %v394 = vunpack.c.l.b16 %v113
    %v395 = vunpack.c.l.b16 %v114
    %v396 = vunpack.c.l.b16 %v115
    %v397 = vunpack.c.l.b16 %v116
    %v398 = vunpack.c.l.b16 %v117
    %v399 = vunpack.c.l.b16 %v118
    %v400 = vunpack.c.l.b16 %v119
    %v401 = vunpack.c.l.b16 %v120
    %v402 = vunpack.c.l.b16 %v121
    %v403 = vunpack.c.l.b16 %v122
    %v404 = vunpack.c.l.b16 %v123
    %v405 = vunpack.c.l.b16 %v124
    %v406 = vunpack.c.l.b16 %v125
    %v407 = vunpack.c.l.b16 %v126
    %v408 = vunpack.c.l.b16 %v127
    %v409 = vunpack.c.l.b16 %v128
    %v410 = vunpack.c.l.b16 %v129
    %v411 = vunpack.c.l.b16 %v130
    %v412 = vunpack.c.l.b16 %v131
    %v413 = vunpack.c.l.b16 %v132
    %v414 = vunpack.c.l.b16 %v133
    %v415 = vunpack.c.l.b16 %v134
    %v416 = vunpack.c.l.b16 %v135
    %v417 = vunpack.c.l.b16 %v136
    %v418 = vunpack.c.l.b16 %v137
    %v419 = vunpack.c.l.b16 %v138
    %v420 = vunpack.c.l.b16 %v139
    %v421 = vpack.c.b16 %v310, %v309
    %v422 = vpack.c.b16 %v312, %v311
    %v423 = vpack.c.b16 %v314, %v313
    %v424 = vpack.c.b16 %v316, %v315
    %v425 = vpack.c.b16 %v318, %v317
    %v426 = vpack.c.b16 %v320, %v319
    %v427 = vpack.c.b16 %v322, %v321
    %v428 = vpack.c.b16 %v324, %v323
    %v429 = vpack.c.b16 %v326, %v325
    %v430 = vpack.c.b16 %v328, %v327
    %v431 = vpack.c.b16 %v330, %v329
    %v432 = vpack.c.b16 %v332, %v331
    %v433 = vpack.c.b16 %v334, %v333
    %v434 = vpack.c.b16 %v336, %v335
    %v435 = vpack.c.b16 %v338, %v337
    %v436 = vpack.c.b16 %v340, %v339
    %v437 = vpack.c.b16 %v342, %v341
    %v438 = vpack.c.b16 %v344, %v343
    %v439 = vpack.c.b16 %v346, %v345
    %v440 = vpack.c.b16 %v348, %v347
    %v441 = vpack.c.b16 %v350, %v349
    %v442 = vpack.c.b16 %v352, %v351
    %v443 = vpack.c.b16 %v354, %v353
    %v444 = vpack.c.b16 %v356, %v355
    %v445 = vpack.c.b16 %v358, %v357
    %v446 = vpack.c.b16 %v360, %v359
    %v447 = vpack.c.b16 %v362, %v361
    %v448 = vpack.c.b16 %v364, %v363
    %v449 = vpack.c.b16 %v366, %v365
    %v450 = vpack.c.b16 %v368, %v367
    %v451 = vpack.c.b16 %v370, %v369
    %v452 = vpack.c.b16 %v372, %v371
    %v453 = vpack.c.b16 %v374, %v373
    %v454 = vpack.c.b16 %v376, %v375
    %v455 = vpack.c.b16 %v378, %v377
    %v456 = vpack.c.b16 %v380, %v379
    %v457 = vpack.c.b16 %v382, %v381
    %v458 = vpack.c.b16 %v384, %v383
    %v459 = vpack.c.b16 %v386, %v385
    %v460 = vpack.c.b16 %v388, %v387
    %v461 = vpack.c.b16 %v390, %v389
    %v462 = vpack.c.b16 %v392, %v391
    %v463 = vpack.c.b16 %v394, %v393
    %v464 = vpack.c.b16 %v396, %v395
    %v465 = vpack.c.b16 %v398, %v397
    %v466 = vpack.c.b16 %v400, %v399
    %v467 = vpack.c.b16 %v402, %v401
    %v468 = vpack.c.b16 %v404, %v403
    %v469 = vpack.c.b16 %v406, %v405
    %v470 = vpack.c.b16 %v408, %v407
    %v471 = vpack.c.b16 %v410, %v409
    %v472 = vpack.c.b16 %v412, %v411
    %v473 = vpack.c.b16 %v414, %v413
    %v474 = vpack.c.b16 %v416, %v415
    %v475 = vpack.c.b16 %v418, %v417
    %v476 = vpack.c.b16 %v420, %v419
    %533 = vmatprep.subr.bf16.mxu0 0
    %534 = vmatpush1.bf16.msra.mxu0 %v421
    %535 = vmatprep.subr.bf16.mxu0 0
    %536 = vmatpush1.bf16.msra.mxu0 %v422
    %537 = vmatprep.subr.bf16.mxu0 0
    %538 = vmatpush1.bf16.msra.mxu0 %v423
    %539 = vmatprep.subr.bf16.mxu0 0
    %540 = vmatpush1.bf16.msra.mxu0 %v424
    %541 = vmatprep.subr.bf16.mxu0 0
    %542 = vmatpush1.bf16.msra.mxu0 %v425
    %543 = vmatprep.subr.bf16.mxu0 0
    %544 = vmatpush1.bf16.msra.mxu0 %v426
    %545 = vmatprep.subr.bf16.mxu0 0
    %546 = vmatpush1.bf16.msra.mxu0 %v427
    %547 = vmatprep.subr.bf16.mxu0 0
    %548 = vmatpush1.bf16.msra.mxu0 %v428
    %549 = vmatprep.subr.bf16.mxu0 0
    %550 = vmatpush1.bf16.msra.mxu0 %v429
    %551 = vmatprep.subr.bf16.mxu0 0
    %552 = vmatpush1.bf16.msra.mxu0 %v430
    %553 = vmatprep.subr.bf16.mxu0 0
    %554 = vmatpush1.bf16.msra.mxu0 %v431
    %555 = vmatprep.subr.bf16.mxu0 0
    %556 = vmatpush1.bf16.msra.mxu0 %v432
    %557 = vmatprep.subr.bf16.mxu0 0
    %558 = vmatpush1.bf16.msra.mxu0 %v433
    %559 = vmatprep.subr.bf16.mxu0 0
    %560 = vmatpush1.bf16.msra.mxu0 %v434
    %561 = vmatprep.subr.bf16.mxu0 0
    %562 = vmatpush1.bf16.msra.mxu0 %v435
    %563 = vmatprep.subr.bf16.mxu0 0
    %564 = vmatpush1.bf16.msra.mxu0 %v436
    %565 = vmatprep.mubr.bf16.mxu0 %v179
    %566 = vmatmul.mubr.bf16.gmra.mrb[0].mxu0 %v165
    %v567 = vpop.f32.mrb[0].mxu0
    %v568 = vadd.f32 0.0, %v567
    %v569 = vpop.f32.mrb[0].mxu0
    %v570 = vpop.f32.mrb[0].mxu0
    %v571 = vpop.f32.mrb[0].mxu0
    %572 = vdwg.mxu0
    %573 = vmatprep.subr.bf16.mxu0 0
    %574 = vmatpush1.bf16.msra.mxu0 %v437
    %575 = vmatprep.subr.bf16.mxu0 0
    %576 = vmatpush1.bf16.msra.mxu0 %v438
    %577 = vmatprep.subr.bf16.mxu0 0
    %578 = vmatpush1.bf16.msra.mxu0 %v439
    %579 = vmatprep.subr.bf16.mxu0 0
    %580 = vmatpush1.bf16.msra.mxu0 %v440
    %581 = vmatprep.subr.bf16.mxu0 0
    %582 = vmatpush1.bf16.msra.mxu0 %v441
    %583 = vmatprep.subr.bf16.mxu0 0
    %584 = vmatpush1.bf16.msra.mxu0 %v442
    %585 = vmatprep.subr.bf16.mxu0 0
    %586 = vmatpush1.bf16.msra.mxu0 %v443
    %587 = vmatprep.subr.bf16.mxu0 0
    %588 = vmatpush1.bf16.msra.mxu0 %v444
    %589 = vmatprep.subr.bf16.mxu0 0
    %590 = vmatpush1.bf16.msra.mxu0 %v445
    %591 = vmatprep.subr.bf16.mxu0 0
    %592 = vmatpush1.bf16.msra.mxu0 %v446
    %593 = vmatprep.subr.bf16.mxu0 0
    %594 = vmatpush1.bf16.msra.mxu0 %v447
    %595 = vmatprep.subr.bf16.mxu0 0
    %596 = vmatpush1.bf16.msra.mxu0 %v448
    %597 = vmatprep.subr.bf16.mxu0 0
    %598 = vmatpush1.bf16.msra.mxu0 %v449
    %599 = vmatprep.subr.bf16.mxu0 0
    %600 = vmatpush1.bf16.msra.mxu0 %v450
    %601 = vmatprep.subr.bf16.mxu0 0
    %602 = vmatpush1.bf16.msra.mxu0 %v451
    %603 = vmatprep.subr.bf16.mxu0 0
    %604 = vmatpush1.bf16.msra.mxu0 %v452
    %605 = vmatprep.mubr.bf16.mxu0 %v189
    %606 = vmatmul.mubr.bf16.gmra.mrb[0].mxu0 %v187
    %v607 = vpop.f32.mrb[0].mxu0
    %v608 = vadd.f32 %v568, %v607
    %v609 = vpop.f32.mrb[0].mxu0
    %v610 = vpop.f32.mrb[0].mxu0
    %v611 = vpop.f32.mrb[0].mxu0
    %612 = vdwg.mxu0
    %613 = vmatprep.subr.bf16.mxu0 0
    %614 = vmatpush1.bf16.msra.mxu0 %v453
    %615 = vmatprep.subr.bf16.mxu0 0
    %616 = vmatpush1.bf16.msra.mxu0 %v454
    %617 = vmatprep.subr.bf16.mxu0 0
    %618 = vmatpush1.bf16.msra.mxu0 %v455
    %619 = vmatprep.subr.bf16.mxu0 0
    %620 = vmatpush1.bf16.msra.mxu0 %v456
    %621 = vmatprep.subr.bf16.mxu0 0
    %622 = vmatpush1.bf16.msra.mxu0 %v457
    %623 = vmatprep.subr.bf16.mxu0 0
    %624 = vmatpush1.bf16.msra.mxu0 %v458
    %625 = vmatprep.subr.bf16.mxu0 0
    %626 = vmatpush1.bf16.msra.mxu0 %v459
    %627 = vmatprep.subr.bf16.mxu0 0
    %628 = vmatpush1.bf16.msra.mxu0 %v460
    %629 = vmatprep.subr.bf16.mxu0 0
    %630 = vmatpush1.bf16.msra.mxu0 %v461
    %631 = vmatprep.subr.bf16.mxu0 0
    %632 = vmatpush1.bf16.msra.mxu0 %v462
    %633 = vmatprep.subr.bf16.mxu0 0
    %634 = vmatpush1.bf16.msra.mxu0 %v463
    %635 = vmatprep.subr.bf16.mxu0 0
    %636 = vmatpush1.bf16.msra.mxu0 %v464
    %637 = vmatprep.subr.bf16.mxu0 0
    %638 = vmatpush1.bf16.msra.mxu0 %v465
    %639 = vmatprep.subr.bf16.mxu0 0
    %640 = vmatpush1.bf16.msra.mxu0 %v466
    %641 = vmatprep.subr.bf16.mxu0 0
    %642 = vmatpush1.bf16.msra.mxu0 %v467
    %643 = vmatprep.subr.bf16.mxu0 0
    %644 = vmatpush1.bf16.msra.mxu0 %v468
    %645 = vmatprep.mubr.bf16.mxu0 %v186
    %646 = vmatmul.mubr.bf16.gmra.mrb[0].mxu0 %v172
    %v647 = vpop.f32.mrb[0].mxu0
    %v648 = vadd.f32 %v608, %v647
    %v649 = vpop.f32.mrb[0].mxu0
    %v650 = vpop.f32.mrb[0].mxu0
    %v651 = vpop.f32.mrb[0].mxu0
    %652 = vdwg.mxu0
    %653 = vmatprep.subr.bf16.mxu0 0
    %654 = vmatpush1.bf16.msra.mxu0 %v469
    %655 = vmatprep.subr.bf16.mxu0 0
    %656 = vmatpush1.bf16.msra.mxu0 %v470
    %657 = vmatprep.subr.bf16.mxu0 0
    %658 = vmatpush1.bf16.msra.mxu0 %v471
    %659 = vmatprep.subr.bf16.mxu0 0
    %660 = vmatpush1.bf16.msra.mxu0 %v472
    %661 = vmatprep.subr.bf16.mxu0 0
    %662 = vmatpush1.bf16.msra.mxu0 %v473
    %663 = vmatprep.subr.bf16.mxu0 0
    %664 = vmatpush1.bf16.msra.mxu0 %v474
    %665 = vmatprep.subr.bf16.mxu0 0
    %666 = vmatpush1.bf16.msra.mxu0 %v475
    %667 = vmatprep.subr.bf16.mxu0 0
    %668 = vmatpush1.bf16.msra.mxu0 %v476
    %669 = vmatprep.subr.bf16.mxu0 0
    %670 = vmatpush1.bf16.msra.mxu0 0
    %671 = vmatprep.subr.bf16.mxu0 0
    %672 = vmatpush1.bf16.msra.mxu0 0
    %673 = vmatprep.subr.bf16.mxu0 0
    %674 = vmatpush1.bf16.msra.mxu0 0
    %675 = vmatprep.subr.bf16.mxu0 0
    %676 = vmatpush1.bf16.msra.mxu0 0
    %677 = vmatprep.subr.bf16.mxu0 0
    %678 = vmatpush1.bf16.msra.mxu0 0
    %679 = vmatprep.subr.bf16.mxu0 0
    %680 = vmatpush1.bf16.msra.mxu0 0
    %681 = vmatprep.subr.bf16.mxu0 0
    %682 = vmatpush1.bf16.msra.mxu0 0
    %683 = vmatprep.subr.bf16.mxu0 0
    %684 = vmatpush1.bf16.msra.mxu0 0
    %685 = vmatprep.mubr.bf16.mxu0 0
    %686 = vmatmul.mubr.bf16.gmra.mrb[0].mxu0 %v188
    %v687 = vpop.f32.mrb[0].mxu0
    %v688 = vadd.f32 %v648, %v687
    %v689 = vpop.f32.mrb[0].mxu0
    %v690 = vpop.f32.mrb[0].mxu0
    %v691 = vpop.f32.mrb[0].mxu0
    %692 = vdwg.mxu0
    %s693 = scalar_lea.vmem %s0, 7
    %v694 = vld [vmem:[%s693] sm:$0x7f]
    %v696 = vcombine.high %v694, %v694
    %v698 = vunpack.c.l.s4 1966171168
    %v699 = vunpack.c.0.s8 %v698
    %v700 = vlaneseq
    %v701 = vshrl.u32 %v700, 7
    %v702 = vsub.s32 %v699, %v701
    %v703 = vrot.slane %v694, %v702
    %v705 = vunpack.c.l.s4 1966171168
    %v706 = vunpack.c.0.s8 %v705
    %v707 = vlaneseq
    %v708 = vshrl.u32 %v707, 7
    %v709 = vsub.s32 %v706, %v708
    %v710 = vrot.slane %v696, %v709
    %v711 = vcombine.high %v703, %v703
    %v712 = vcombine.high %v710, %v710
    %v714 = vunpack.c.l.s4 1966171168
    %v715 = vunpack.c.0.s8 %v714
    %v716 = vlaneseq
    %v717 = vshrl.u32 %v716, 7
    %v718 = vsub.s32 %v715, %v717
    %v719 = vrot.slane %v703, %v718
    %v721 = vunpack.c.l.s4 1966171168
    %v722 = vunpack.c.0.s8 %v721
    %v723 = vlaneseq
    %v724 = vshrl.u32 %v723, 7
    %v725 = vsub.s32 %v722, %v724
    %v726 = vrot.slane %v710, %v725
    %v728 = vunpack.c.l.s4 1966171168
    %v729 = vunpack.c.0.s8 %v728
    %v730 = vlaneseq
    %v731 = vshrl.u32 %v730, 7
    %v732 = vsub.s32 %v729, %v731
    %v733 = vrot.slane %v711, %v732
    %v735 = vunpack.c.l.s4 1966171168
    %v736 = vunpack.c.0.s8 %v735
    %v737 = vlaneseq
    %v738 = vshrl.u32 %v737, 7
    %v739 = vsub.s32 %v736, %v738
    %v740 = vrot.slane %v712, %v739
    %v741 = vcombine.high %v719, %v719
    %v742 = vcombine.high %v726, %v726
    %v743 = vcombine.high %v733, %v733
    %751 = vmatprep.subr.bf16.mxu0 0
    %752 = vmatpush1.bf16.msra.mxu0 %v421
    %753 = vmatprep.subr.bf16.mxu0 0
    %754 = vmatpush1.bf16.msra.mxu0 %v422
    %755 = vmatprep.subr.bf16.mxu0 0
    %756 = vmatpush1.bf16.msra.mxu0 %v423
    %757 = vmatprep.subr.bf16.mxu0 0
    %758 = vmatpush1.bf16.msra.mxu0 %v424
    %759 = vmatprep.subr.bf16.mxu0 0
    %760 = vmatpush1.bf16.msra.mxu0 %v425
    %761 = vmatprep.subr.bf16.mxu0 0
    %762 = vmatpush1.bf16.msra.mxu0 %v426
    %763 = vmatprep.subr.bf16.mxu0 0
    %764 = vmatpush1.bf16.msra.mxu0 %v427
    %765 = vmatprep.subr.bf16.mxu0 0
    %766 = vmatpush1.bf16.msra.mxu0 %v428
    %767 = vmatprep.subr.bf16.mxu0 0
    %768 = vmatpush1.bf16.msra.mxu0 %v429
    %769 = vmatprep.subr.bf16.mxu0 0
    %770 = vmatpush1.bf16.msra.mxu0 %v430
    %771 = vmatprep.subr.bf16.mxu0 0
    %772 = vmatpush1.bf16.msra.mxu0 %v431
    %773 = vmatprep.subr.bf16.mxu0 0
    %774 = vmatpush1.bf16.msra.mxu0 %v432
    %775 = vmatprep.subr.bf16.mxu0 0
    %776 = vmatpush1.bf16.msra.mxu0 %v433
    %777 = vmatprep.subr.bf16.mxu0 0
    %778 = vmatpush1.bf16.msra.mxu0 %v434
    %779 = vmatprep.subr.bf16.mxu0 0
    %780 = vmatpush1.bf16.msra.mxu0 %v435
    %781 = vmatprep.subr.bf16.mxu0 0
    %782 = vmatpush1.bf16.msra.mxu0 %v436
    %783 = vmatprep.mubr.bf16.mxu0 %v733
    %784 = vmatmul.mubr.bf16.gmra.mrb[0].mxu0 %v719
    %v785 = vpop.f32.mrb[0].mxu0
    %v786 = vadd.f32 0.0, %v785
    %v787 = vpop.f32.mrb[0].mxu0
    %v788 = vpop.f32.mrb[0].mxu0
    %v789 = vpop.f32.mrb[0].mxu0
    %790 = vdwg.mxu0
    %791 = vmatprep.subr.bf16.mxu0 0
    %792 = vmatpush1.bf16.msra.mxu0 %v437
    %793 = vmatprep.subr.bf16.mxu0 0
    %794 = vmatpush1.bf16.msra.mxu0 %v438
    %795 = vmatprep.subr.bf16.mxu0 0
    %796 = vmatpush1.bf16.msra.mxu0 %v439
    %797 = vmatprep.subr.bf16.mxu0 0
    %798 = vmatpush1.bf16.msra.mxu0 %v440
    %799 = vmatprep.subr.bf16.mxu0 0
    %800 = vmatpush1.bf16.msra.mxu0 %v441
    %801 = vmatprep.subr.bf16.mxu0 0
    %802 = vmatpush1.bf16.msra.mxu0 %v442
    %803 = vmatprep.subr.bf16.mxu0 0
    %804 = vmatpush1.bf16.msra.mxu0 %v443
    %805 = vmatprep.subr.bf16.mxu0 0
    %806 = vmatpush1.bf16.msra.mxu0 %v444
    %807 = vmatprep.subr.bf16.mxu0 0
    %808 = vmatpush1.bf16.msra.mxu0 %v445
    %809 = vmatprep.subr.bf16.mxu0 0
    %810 = vmatpush1.bf16.msra.mxu0 %v446
    %811 = vmatprep.subr.bf16.mxu0 0
    %812 = vmatpush1.bf16.msra.mxu0 %v447
    %813 = vmatprep.subr.bf16.mxu0 0
    %814 = vmatpush1.bf16.msra.mxu0 %v448
    %815 = vmatprep.subr.bf16.mxu0 0
    %816 = vmatpush1.bf16.msra.mxu0 %v449
    %817 = vmatprep.subr.bf16.mxu0 0
    %818 = vmatpush1.bf16.msra.mxu0 %v450
    %819 = vmatprep.subr.bf16.mxu0 0
    %820 = vmatpush1.bf16.msra.mxu0 %v451
    %821 = vmatprep.subr.bf16.mxu0 0
    %822 = vmatpush1.bf16.msra.mxu0 %v452
    %823 = vmatprep.mubr.bf16.mxu0 %v743
    %824 = vmatmul.mubr.bf16.gmra.mrb[0].mxu0 %v741
    %v825 = vpop.f32.mrb[0].mxu0
    %v826 = vadd.f32 %v786, %v825
    %v827 = vpop.f32.mrb[0].mxu0
    %v828 = vpop.f32.mrb[0].mxu0
    %v829 = vpop.f32.mrb[0].mxu0
    %830 = vdwg.mxu0
    %831 = vmatprep.subr.bf16.mxu0 0
    %832 = vmatpush1.bf16.msra.mxu0 %v453
    %833 = vmatprep.subr.bf16.mxu0 0
    %834 = vmatpush1.bf16.msra.mxu0 %v454
    %835 = vmatprep.subr.bf16.mxu0 0
    %836 = vmatpush1.bf16.msra.mxu0 %v455
    %837 = vmatprep.subr.bf16.mxu0 0
    %838 = vmatpush1.bf16.msra.mxu0 %v456
    %839 = vmatprep.subr.bf16.mxu0 0
    %840 = vmatpush1.bf16.msra.mxu0 %v457
    %841 = vmatprep.subr.bf16.mxu0 0
    %842 = vmatpush1.bf16.msra.mxu0 %v458
    %843 = vmatprep.subr.bf16.mxu0 0
    %844 = vmatpush1.bf16.msra.mxu0 %v459
    %845 = vmatprep.subr.bf16.mxu0 0
    %846 = vmatpush1.bf16.msra.mxu0 %v460
    %847 = vmatprep.subr.bf16.mxu0 0
    %848 = vmatpush1.bf16.msra.mxu0 %v461
    %849 = vmatprep.subr.bf16.mxu0 0
    %850 = vmatpush1.bf16.msra.mxu0 %v462
    %851 = vmatprep.subr.bf16.mxu0 0
    %852 = vmatpush1.bf16.msra.mxu0 %v463
    %853 = vmatprep.subr.bf16.mxu0 0
    %854 = vmatpush1.bf16.msra.mxu0 %v464
    %855 = vmatprep.subr.bf16.mxu0 0
    %856 = vmatpush1.bf16.msra.mxu0 %v465
    %857 = vmatprep.subr.bf16.mxu0 0
    %858 = vmatpush1.bf16.msra.mxu0 %v466
    %859 = vmatprep.subr.bf16.mxu0 0
    %860 = vmatpush1.bf16.msra.mxu0 %v467
    %861 = vmatprep.subr.bf16.mxu0 0
    %862 = vmatpush1.bf16.msra.mxu0 %v468
    %863 = vmatprep.mubr.bf16.mxu0 %v740
    %864 = vmatmul.mubr.bf16.gmra.mrb[0].mxu0 %v726
    %v865 = vpop.f32.mrb[0].mxu0
    %v866 = vadd.f32 %v826, %v865
    %v867 = vpop.f32.mrb[0].mxu0
    %v868 = vpop.f32.mrb[0].mxu0
    %v869 = vpop.f32.mrb[0].mxu0
    %870 = vdwg.mxu0
    %871 = vmatprep.subr.bf16.mxu0 0
    %872 = vmatpush1.bf16.msra.mxu0 %v469
    %873 = vmatprep.subr.bf16.mxu0 0
    %874 = vmatpush1.bf16.msra.mxu0 %v470
    %875 = vmatprep.subr.bf16.mxu0 0
    %876 = vmatpush1.bf16.msra.mxu0 %v471
    %877 = vmatprep.subr.bf16.mxu0 0
    %878 = vmatpush1.bf16.msra.mxu0 %v472
    %879 = vmatprep.subr.bf16.mxu0 0
    %880 = vmatpush1.bf16.msra.mxu0 %v473
    %881 = vmatprep.subr.bf16.mxu0 0
    %882 = vmatpush1.bf16.msra.mxu0 %v474
    %883 = vmatprep.subr.bf16.mxu0 0
    %884 = vmatpush1.bf16.msra.mxu0 %v475
    %885 = vmatprep.subr.bf16.mxu0 0
    %886 = vmatpush1.bf16.msra.mxu0 %v476
    %887 = vmatprep.subr.bf16.mxu0 0
    %888 = vmatpush1.bf16.msra.mxu0 0
    %889 = vmatprep.subr.bf16.mxu0 0
    %890 = vmatpush1.bf16.msra.mxu0 0
    %891 = vmatprep.subr.bf16.mxu0 0
    %892 = vmatpush1.bf16.msra.mxu0 0
    %893 = vmatprep.subr.bf16.mxu0 0
    %894 = vmatpush1.bf16.msra.mxu0 0
    %895 = vmatprep.subr.bf16.mxu0 0
    %896 = vmatpush1.bf16.msra.mxu0 0
    %897 = vmatprep.subr.bf16.mxu0 0
    %898 = vmatpush1.bf16.msra.mxu0 0
    %899 = vmatprep.subr.bf16.mxu0 0
    %900 = vmatpush1.bf16.msra.mxu0 0
    %901 = vmatprep.subr.bf16.mxu0 0
    %902 = vmatpush1.bf16.msra.mxu0 0
    %903 = vmatprep.mubr.bf16.mxu0 0
    %904 = vmatmul.mubr.bf16.gmra.mrb[0].mxu0 %v742
    %v905 = vpop.f32.mrb[0].mxu0
    %v906 = vadd.f32 %v866, %v905
    %v907 = vpop.f32.mrb[0].mxu0
    %v908 = vpop.f32.mrb[0].mxu0
    %v909 = vpop.f32.mrb[0].mxu0
    %910 = vdwg.mxu0
    %s911 = scalar_lea.vmem %s0, 14
    %v912 = vld [vmem:[%s911] sm:$0x7f]
    %v914 = vcombine.high %v912, %v912
    %v916 = vunpack.c.l.s4 1966171168
    %v917 = vunpack.c.0.s8 %v916
    %v918 = vlaneseq
    %v919 = vshrl.u32 %v918, 7
    %v920 = vsub.s32 %v917, %v919
    %v921 = vrot.slane %v912, %v920
    %v923 = vunpack.c.l.s4 1966171168
    %v924 = vunpack.c.0.s8 %v923
    %v925 = vlaneseq
    %v926 = vshrl.u32 %v925, 7
    %v927 = vsub.s32 %v924, %v926
    %v928 = vrot.slane %v914, %v927
    %v929 = vcombine.high %v921, %v921
    %v930 = vcombine.high %v928, %v928
    %v932 = vunpack.c.l.s4 1966171168
    %v933 = vunpack.c.0.s8 %v932
    %v934 = vlaneseq
    %v935 = vshrl.u32 %v934, 7
    %v936 = vsub.s32 %v933, %v935
    %v937 = vrot.slane %v921, %v936
    %v939 = vunpack.c.l.s4 1966171168
    %v940 = vunpack.c.0.s8 %v939
    %v941 = vlaneseq
    %v942 = vshrl.u32 %v941, 7
    %v943 = vsub.s32 %v940, %v942
    %v944 = vrot.slane %v928, %v943
    %v946 = vunpack.c.l.s4 1966171168
    %v947 = vunpack.c.0.s8 %v946
    %v948 = vlaneseq
    %v949 = vshrl.u32 %v948, 7
    %v950 = vsub.s32 %v947, %v949
    %v951 = vrot.slane %v929, %v950
    %v953 = vunpack.c.l.s4 1966171168
    %v954 = vunpack.c.0.s8 %v953
    %v955 = vlaneseq
    %v956 = vshrl.u32 %v955, 7
    %v957 = vsub.s32 %v954, %v956
    %v958 = vrot.slane %v930, %v957
    %v959 = vcombine.high %v937, %v937
    %v960 = vcombine.high %v944, %v944
    %v961 = vcombine.high %v951, %v951
    %969 = vmatprep.subr.bf16.mxu0 0
    %970 = vmatpush1.bf16.msra.mxu0 %v421
    %971 = vmatprep.subr.bf16.mxu0 0
    %972 = vmatpush1.bf16.msra.mxu0 %v422
    %973 = vmatprep.subr.bf16.mxu0 0
    %974 = vmatpush1.bf16.msra.mxu0 %v423
    %975 = vmatprep.subr.bf16.mxu0 0
    %976 = vmatpush1.bf16.msra.mxu0 %v424
    %977 = vmatprep.subr.bf16.mxu0 0
    %978 = vmatpush1.bf16.msra.mxu0 %v425
    %979 = vmatprep.subr.bf16.mxu0 0
    %980 = vmatpush1.bf16.msra.mxu0 %v426
    %981 = vmatprep.subr.bf16.mxu0 0
    %982 = vmatpush1.bf16.msra.mxu0 %v427
    %983 = vmatprep.subr.bf16.mxu0 0
    %984 = vmatpush1.bf16.msra.mxu0 %v428
    %985 = vmatprep.subr.bf16.mxu0 0
    %986 = vmatpush1.bf16.msra.mxu0 %v429
    %987 = vmatprep.subr.bf16.mxu0 0
    %988 = vmatpush1.bf16.msra.mxu0 %v430
    %989 = vmatprep.subr.bf16.mxu0 0
    %990 = vmatpush1.bf16.msra.mxu0 %v431
    %991 = vmatprep.subr.bf16.mxu0 0
    %992 = vmatpush1.bf16.msra.mxu0 %v432
    %993 = vmatprep.subr.bf16.mxu0 0
    %994 = vmatpush1.bf16.msra.mxu0 %v433
    %995 = vmatprep.subr.bf16.mxu0 0
    %996 = vmatpush1.bf16.msra.mxu0 %v434
    %997 = vmatprep.subr.bf16.mxu0 0
    %998 = vmatpush1.bf16.msra.mxu0 %v435
    %999 = vmatprep.subr.bf16.mxu0 0
    %1000 = vmatpush1.bf16.msra.mxu0 %v436
    %1001 = vmatprep.mubr.bf16.mxu0 %v951
    %1002 = vmatmul.mubr.bf16.gmra.mrb[0].mxu0 %v937
    %v1003 = vpop.f32.mrb[0].mxu0
    %v1004 = vadd.f32 0.0, %v1003
    %v1005 = vpop.f32.mrb[0].mxu0
    %v1006 = vpop.f32.mrb[0].mxu0
    %v1007 = vpop.f32.mrb[0].mxu0
    %1008 = vdwg.mxu0
    %1009 = vmatprep.subr.bf16.mxu0 0
    %1010 = vmatpush1.bf16.msra.mxu0 %v437
    %1011 = vmatprep.subr.bf16.mxu0 0
    %1012 = vmatpush1.bf16.msra.mxu0 %v438
    %1013 = vmatprep.subr.bf16.mxu0 0
    %1014 = vmatpush1.bf16.msra.mxu0 %v439
    %1015 = vmatprep.subr.bf16.mxu0 0
    %1016 = vmatpush1.bf16.msra.mxu0 %v440
    %1017 = vmatprep.subr.bf16.mxu0 0
    %1018 = vmatpush1.bf16.msra.mxu0 %v441
    %1019 = vmatprep.subr.bf16.mxu0 0
    %1020 = vmatpush1.bf16.msra.mxu0 %v442
    %1021 = vmatprep.subr.bf16.mxu0 0
    %1022 = vmatpush1.bf16.msra.mxu0 %v443
    %1023 = vmatprep.subr.bf16.mxu0 0
    %1024 = vmatpush1.bf16.msra.mxu0 %v444
    %1025 = vmatprep.subr.bf16.mxu0 0
    %1026 = vmatpush1.bf16.msra.mxu0 %v445
    %1027 = vmatprep.subr.bf16.mxu0 0
    %1028 = vmatpush1.bf16.msra.mxu0 %v446
    %1029 = vmatprep.subr.bf16.mxu0 0
    %1030 = vmatpush1.bf16.msra.mxu0 %v447
    %1031 = vmatprep.subr.bf16.mxu0 0
    %1032 = vmatpush1.bf16.msra.mxu0 %v448
    %1033 = vmatprep.subr.bf16.mxu0 0
    %1034 = vmatpush1.bf16.msra.mxu0 %v449
    %1035 = vmatprep.subr.bf16.mxu0 0
    %1036 = vmatpush1.bf16.msra.mxu0 %v450
    %1037 = vmatprep.subr.bf16.mxu0 0
    %1038 = vmatpush1.bf16.msra.mxu0 %v451
    %1039 = vmatprep.subr.bf16.mxu0 0
    %1040 = vmatpush1.bf16.msra.mxu0 %v452
    %1041 = vmatprep.mubr.bf16.mxu0 %v961
    %1042 = vmatmul.mubr.bf16.gmra.mrb[0].mxu0 %v959
    %v1043 = vpop.f32.mrb[0].mxu0
    %v1044 = vadd.f32 %v1004, %v1043
    %v1045 = vpop.f32.mrb[0].mxu0
    %v1046 = vpop.f32.mrb[0].mxu0
    %v1047 = vpop.f32.mrb[0].mxu0
    %1048 = vdwg.mxu0
    %1049 = vmatprep.subr.bf16.mxu0 0
    %1050 = vmatpush1.bf16.msra.mxu0 %v453
    %1051 = vmatprep.subr.bf16.mxu0 0
    %1052 = vmatpush1.bf16.msra.mxu0 %v454
    %1053 = vmatprep.subr.bf16.mxu0 0
    %1054 = vmatpush1.bf16.msra.mxu0 %v455
    %1055 = vmatprep.subr.bf16.mxu0 0
    %1056 = vmatpush1.bf16.msra.mxu0 %v456
    %1057 = vmatprep.subr.bf16.mxu0 0
    %1058 = vmatpush1.bf16.msra.mxu0 %v457
    %1059 = vmatprep.subr.bf16.mxu0 0
    %1060 = vmatpush1.bf16.msra.mxu0 %v458
    %1061 = vmatprep.subr.bf16.mxu0 0
    %1062 = vmatpush1.bf16.msra.mxu0 %v459
    %1063 = vmatprep.subr.bf16.mxu0 0
    %1064 = vmatpush1.bf16.msra.mxu0 %v460
    %1065 = vmatprep.subr.bf16.mxu0 0
    %1066 = vmatpush1.bf16.msra.mxu0 %v461
    %1067 = vmatprep.subr.bf16.mxu0 0
    %1068 = vmatpush1.bf16.msra.mxu0 %v462
    %1069 = vmatprep.subr.bf16.mxu0 0
    %1070 = vmatpush1.bf16.msra.mxu0 %v463
    %1071 = vmatprep.subr.bf16.mxu0 0
    %1072 = vmatpush1.bf16.msra.mxu0 %v464
    %1073 = vmatprep.subr.bf16.mxu0 0
    %1074 = vmatpush1.bf16.msra.mxu0 %v465
    %1075 = vmatprep.subr.bf16.mxu0 0
    %1076 = vmatpush1.bf16.msra.mxu0 %v466
    %1077 = vmatprep.subr.bf16.mxu0 0
    %1078 = vmatpush1.bf16.msra.mxu0 %v467
    %1079 = vmatprep.subr.bf16.mxu0 0
    %1080 = vmatpush1.bf16.msra.mxu0 %v468
    %1081 = vmatprep.mubr.bf16.mxu0 %v958
    %1082 = vmatmul.mubr.bf16.gmra.mrb[0].mxu0 %v944
    %v1083 = vpop.f32.mrb[0].mxu0
    %v1084 = vadd.f32 %v1044, %v1083
    %v1085 = vpop.f32.mrb[0].mxu0
    %v1086 = vpop.f32.mrb[0].mxu0
    %v1087 = vpop.f32.mrb[0].mxu0
    %1088 = vdwg.mxu0
    %1089 = vmatprep.subr.bf16.mxu0 0
    %1090 = vmatpush1.bf16.msra.mxu0 %v469
    %1091 = vmatprep.subr.bf16.mxu0 0
    %1092 = vmatpush1.bf16.msra.mxu0 %v470
    %1093 = vmatprep.subr.bf16.mxu0 0
    %1094 = vmatpush1.bf16.msra.mxu0 %v471
    %1095 = vmatprep.subr.bf16.mxu0 0
    %1096 = vmatpush1.bf16.msra.mxu0 %v472
    %1097 = vmatprep.subr.bf16.mxu0 0
    %1098 = vmatpush1.bf16.msra.mxu0 %v473
    %1099 = vmatprep.subr.bf16.mxu0 0
    %1100 = vmatpush1.bf16.msra.mxu0 %v474
    %1101 = vmatprep.subr.bf16.mxu0 0
    %1102 = vmatpush1.bf16.msra.mxu0 %v475
    %1103 = vmatprep.subr.bf16.mxu0 0
    %1104 = vmatpush1.bf16.msra.mxu0 %v476
    %1105 = vmatprep.subr.bf16.mxu0 0
    %1106 = vmatpush1.bf16.msra.mxu0 0
    %1107 = vmatprep.subr.bf16.mxu0 0
    %1108 = vmatpush1.bf16.msra.mxu0 0
    %1109 = vmatprep.subr.bf16.mxu0 0
    %1110 = vmatpush1.bf16.msra.mxu0 0
    %1111 = vmatprep.subr.bf16.mxu0 0
    %1112 = vmatpush1.bf16.msra.mxu0 0
    %1113 = vmatprep.subr.bf16.mxu0 0
    %1114 = vmatpush1.bf16.msra.mxu0 0
    %1115 = vmatprep.subr.bf16.mxu0 0
    %1116 = vmatpush1.bf16.msra.mxu0 0
    %1117 = vmatprep.subr.bf16.mxu0 0
    %1118 = vmatpush1.bf16.msra.mxu0 0
    %1119 = vmatprep.subr.bf16.mxu0 0
    %1120 = vmatpush1.bf16.msra.mxu0 0
    %1121 = vmatprep.mubr.bf16.mxu0 0
    %1122 = vmatmul.mubr.bf16.gmra.mrb[0].mxu0 %v960
    %v1123 = vpop.f32.mrb[0].mxu0
    %v1124 = vadd.f32 %v1084, %v1123
    %v1125 = vpop.f32.mrb[0].mxu0
    %v1126 = vpop.f32.mrb[0].mxu0
    %v1127 = vpop.f32.mrb[0].mxu0
    %1128 = vdwg.mxu0
    %s1129 = scalar_lea.vmem %s0, 21
    %v1130 = vld [vmem:[%s1129] sm:$0x7f]
    %v1132 = vcombine.high %v1130, %v1130
    %v1134 = vunpack.c.l.s4 1966171168
    %v1135 = vunpack.c.0.s8 %v1134
    %v1136 = vlaneseq
    %v1137 = vshrl.u32 %v1136, 7
    %v1138 = vsub.s32 %v1135, %v1137
    %v1139 = vrot.slane %v1130, %v1138
    %v1141 = vunpack.c.l.s4 1966171168
    %v1142 = vunpack.c.0.s8 %v1141
    %v1143 = vlaneseq
    %v1144 = vshrl.u32 %v1143, 7
    %v1145 = vsub.s32 %v1142, %v1144
    %v1146 = vrot.slane %v1132, %v1145
    %v1147 = vcombine.high %v1139, %v1139
    %v1148 = vcombine.high %v1146, %v1146
    %v1150 = vunpack.c.l.s4 1966171168
    %v1151 = vunpack.c.0.s8 %v1150
    %v1152 = vlaneseq
    %v1153 = vshrl.u32 %v1152, 7
    %v1154 = vsub.s32 %v1151, %v1153
    %v1155 = vrot.slane %v1139, %v1154
    %v1157 = vunpack.c.l.s4 1966171168
    %v1158 = vunpack.c.0.s8 %v1157
    %v1159 = vlaneseq
    %v1160 = vshrl.u32 %v1159, 7
    %v1161 = vsub.s32 %v1158, %v1160
    %v1162 = vrot.slane %v1146, %v1161
    %v1164 = vunpack.c.l.s4 1966171168
    %v1165 = vunpack.c.0.s8 %v1164
    %v1166 = vlaneseq
    %v1167 = vshrl.u32 %v1166, 7
    %v1168 = vsub.s32 %v1165, %v1167
    %v1169 = vrot.slane %v1147, %v1168
    %v1171 = vunpack.c.l.s4 1966171168
    %v1172 = vunpack.c.0.s8 %v1171
    %v1173 = vlaneseq
    %v1174 = vshrl.u32 %v1173, 7
    %v1175 = vsub.s32 %v1172, %v1174
    %v1176 = vrot.slane %v1148, %v1175
    %v1177 = vcombine.high %v1155, %v1155
    %v1178 = vcombine.high %v1162, %v1162
    %v1179 = vcombine.high %v1169, %v1169
    %1187 = vmatprep.subr.bf16.mxu0 0
    %1188 = vmatpush1.bf16.msra.mxu0 %v421
    %1189 = vmatprep.subr.bf16.mxu0 0
    %1190 = vmatpush1.bf16.msra.mxu0 %v422
    %1191 = vmatprep.subr.bf16.mxu0 0
    %1192 = vmatpush1.bf16.msra.mxu0 %v423
    %1193 = vmatprep.subr.bf16.mxu0 0
    %1194 = vmatpush1.bf16.msra.mxu0 %v424
    %1195 = vmatprep.subr.bf16.mxu0 0
    %1196 = vmatpush1.bf16.msra.mxu0 %v425
    %1197 = vmatprep.subr.bf16.mxu0 0
    %1198 = vmatpush1.bf16.msra.mxu0 %v426
    %1199 = vmatprep.subr.bf16.mxu0 0
    %1200 = vmatpush1.bf16.msra.mxu0 %v427
    %1201 = vmatprep.subr.bf16.mxu0 0
    %1202 = vmatpush1.bf16.msra.mxu0 %v428
    %1203 = vmatprep.subr.bf16.mxu0 0
    %1204 = vmatpush1.bf16.msra.mxu0 %v429
    %1205 = vmatprep.subr.bf16.mxu0 0
    %1206 = vmatpush1.bf16.msra.mxu0 %v430
    %1207 = vmatprep.subr.bf16.mxu0 0
    %1208 = vmatpush1.bf16.msra.mxu0 %v431
    %1209 = vmatprep.subr.bf16.mxu0 0
    %1210 = vmatpush1.bf16.msra.mxu0 %v432
    %1211 = vmatprep.subr.bf16.mxu0 0
    %1212 = vmatpush1.bf16.msra.mxu0 %v433
    %1213 = vmatprep.subr.bf16.mxu0 0
    %1214 = vmatpush1.bf16.msra.mxu0 %v434
    %1215 = vmatprep.subr.bf16.mxu0 0
    %1216 = vmatpush1.bf16.msra.mxu0 %v435
    %1217 = vmatprep.subr.bf16.mxu0 0
    %1218 = vmatpush1.bf16.msra.mxu0 %v436
    %1219 = vmatprep.mubr.bf16.mxu0 %v1169
    %1220 = vmatmul.mubr.bf16.gmra.mrb[0].mxu0 %v1155
    %v1221 = vpop.f32.mrb[0].mxu0
    %v1222 = vadd.f32 0.0, %v1221
    %v1223 = vpop.f32.mrb[0].mxu0
    %v1224 = vpop.f32.mrb[0].mxu0
    %v1225 = vpop.f32.mrb[0].mxu0
    %1226 = vdwg.mxu0
    %1227 = vmatprep.subr.bf16.mxu0 0
    %1228 = vmatpush1.bf16.msra.mxu0 %v437
    %1229 = vmatprep.subr.bf16.mxu0 0
    %1230 = vmatpush1.bf16.msra.mxu0 %v438
    %1231 = vmatprep.subr.bf16.mxu0 0
    %1232 = vmatpush1.bf16.msra.mxu0 %v439
    %1233 = vmatprep.subr.bf16.mxu0 0
    %1234 = vmatpush1.bf16.msra.mxu0 %v440
    %1235 = vmatprep.subr.bf16.mxu0 0
    %1236 = vmatpush1.bf16.msra.mxu0 %v441
    %1237 = vmatprep.subr.bf16.mxu0 0
    %1238 = vmatpush1.bf16.msra.mxu0 %v442
    %1239 = vmatprep.subr.bf16.mxu0 0
    %1240 = vmatpush1.bf16.msra.mxu0 %v443
    %1241 = vmatprep.subr.bf16.mxu0 0
    %1242 = vmatpush1.bf16.msra.mxu0 %v444
    %1243 = vmatprep.subr.bf16.mxu0 0
    %1244 = vmatpush1.bf16.msra.mxu0 %v445
    %1245 = vmatprep.subr.bf16.mxu0 0
    %1246 = vmatpush1.bf16.msra.mxu0 %v446
    %1247 = vmatprep.subr.bf16.mxu0 0
    %1248 = vmatpush1.bf16.msra.mxu0 %v447
    %1249 = vmatprep.subr.bf16.mxu0 0
    %1250 = vmatpush1.bf16.msra.mxu0 %v448
    %1251 = vmatprep.subr.bf16.mxu0 0
    %1252 = vmatpush1.bf16.msra.mxu0 %v449
    %1253 = vmatprep.subr.bf16.mxu0 0
    %1254 = vmatpush1.bf16.msra.mxu0 %v450
    %1255 = vmatprep.subr.bf16.mxu0 0
    %1256 = vmatpush1.bf16.msra.mxu0 %v451
    %1257 = vmatprep.subr.bf16.mxu0 0
    %1258 = vmatpush1.bf16.msra.mxu0 %v452
    %1259 = vmatprep.mubr.bf16.mxu0 %v1179
    %1260 = vmatmul.mubr.bf16.gmra.mrb[0].mxu0 %v1177
    %v1261 = vpop.f32.mrb[0].mxu0
    %v1262 = vadd.f32 %v1222, %v1261
    %v1263 = vpop.f32.mrb[0].mxu0
    %v1264 = vpop.f32.mrb[0].mxu0
    %v1265 = vpop.f32.mrb[0].mxu0
    %1266 = vdwg.mxu0
    %1267 = vmatprep.subr.bf16.mxu0 0
    %1268 = vmatpush1.bf16.msra.mxu0 %v453
    %1269 = vmatprep.subr.bf16.mxu0 0
    %1270 = vmatpush1.bf16.msra.mxu0 %v454
    %1271 = vmatprep.subr.bf16.mxu0 0
    %1272 = vmatpush1.bf16.msra.mxu0 %v455
    %1273 = vmatprep.subr.bf16.mxu0 0
    %1274 = vmatpush1.bf16.msra.mxu0 %v456
    %1275 = vmatprep.subr.bf16.mxu0 0
    %1276 = vmatpush1.bf16.msra.mxu0 %v457
    %1277 = vmatprep.subr.bf16.mxu0 0
    %1278 = vmatpush1.bf16.msra.mxu0 %v458
    %1279 = vmatprep.subr.bf16.mxu0 0
    %1280 = vmatpush1.bf16.msra.mxu0 %v459
    %1281 = vmatprep.subr.bf16.mxu0 0
    %1282 = vmatpush1.bf16.msra.mxu0 %v460
    %1283 = vmatprep.subr.bf16.mxu0 0
    %1284 = vmatpush1.bf16.msra.mxu0 %v461
    %1285 = vmatprep.subr.bf16.mxu0 0
    %1286 = vmatpush1.bf16.msra.mxu0 %v462
    %1287 = vmatprep.subr.bf16.mxu0 0
    %1288 = vmatpush1.bf16.msra.mxu0 %v463
    %1289 = vmatprep.subr.bf16.mxu0 0
    %1290 = vmatpush1.bf16.msra.mxu0 %v464
    %1291 = vmatprep.subr.bf16.mxu0 0
    %1292 = vmatpush1.bf16.msra.mxu0 %v465
    %1293 = vmatprep.subr.bf16.mxu0 0
    %1294 = vmatpush1.bf16.msra.mxu0 %v466
    %1295 = vmatprep.subr.bf16.mxu0 0
    %1296 = vmatpush1.bf16.msra.mxu0 %v467
    %1297 = vmatprep.subr.bf16.mxu0 0
    %1298 = vmatpush1.bf16.msra.mxu0 %v468
    %1299 = vmatprep.mubr.bf16.mxu0 %v1176
    %1300 = vmatmul.mubr.bf16.gmra.mrb[0].mxu0 %v1162
    %v1301 = vpop.f32.mrb[0].mxu0
    %v1302 = vadd.f32 %v1262, %v1301
    %v1303 = vpop.f32.mrb[0].mxu0
    %v1304 = vpop.f32.mrb[0].mxu0
    %v1305 = vpop.f32.mrb[0].mxu0
    %1306 = vdwg.mxu0
    %1307 = vmatprep.subr.bf16.mxu0 0
    %1308 = vmatpush1.bf16.msra.mxu0 %v469
    %1309 = vmatprep.subr.bf16.mxu0 0
    %1310 = vmatpush1.bf16.msra.mxu0 %v470
    %1311 = vmatprep.subr.bf16.mxu0 0
    %1312 = vmatpush1.bf16.msra.mxu0 %v471
    %1313 = vmatprep.subr.bf16.mxu0 0
    %1314 = vmatpush1.bf16.msra.mxu0 %v472
    %1315 = vmatprep.subr.bf16.mxu0 0
    %1316 = vmatpush1.bf16.msra.mxu0 %v473
    %1317 = vmatprep.subr.bf16.mxu0 0
    %1318 = vmatpush1.bf16.msra.mxu0 %v474
    %1319 = vmatprep.subr.bf16.mxu0 0
    %1320 = vmatpush1.bf16.msra.mxu0 %v475
    %1321 = vmatprep.subr.bf16.mxu0 0
    %1322 = vmatpush1.bf16.msra.mxu0 %v476
    %1323 = vmatprep.subr.bf16.mxu0 0
    %1324 = vmatpush1.bf16.msra.mxu0 0
    %1325 = vmatprep.subr.bf16.mxu0 0
    %1326 = vmatpush1.bf16.msra.mxu0 0
    %1327 = vmatprep.subr.bf16.mxu0 0
    %1328 = vmatpush1.bf16.msra.mxu0 0
    %1329 = vmatprep.subr.bf16.mxu0 0
    %1330 = vmatpush1.bf16.msra.mxu0 0
    %1331 = vmatprep.subr.bf16.mxu0 0
    %1332 = vmatpush1.bf16.msra.mxu0 0
    %1333 = vmatprep.subr.bf16.mxu0 0
    %1334 = vmatpush1.bf16.msra.mxu0 0
    %1335 = vmatprep.subr.bf16.mxu0 0
    %1336 = vmatpush1.bf16.msra.mxu0 0
    %1337 = vmatprep.subr.bf16.mxu0 0
    %1338 = vmatpush1.bf16.msra.mxu0 0
    %1339 = vmatprep.mubr.bf16.mxu0 0
    %1340 = vmatmul.mubr.bf16.gmra.mrb[0].mxu0 %v1178
    %v1341 = vpop.f32.mrb[0].mxu0
    %v1342 = vadd.f32 %v1302, %v1341
    %v1343 = vpop.f32.mrb[0].mxu0
    %v1344 = vpop.f32.mrb[0].mxu0
    %v1345 = vpop.f32.mrb[0].mxu0
    %1346 = vdwg.mxu0
    %v1347 = vmax.f32 %v688, %v906
    %v1348 = vmax.f32 %v1124, %v1342
    %v1349 = vmax.f32 %v1347, %v1348
    %v1350 = vld [vmem:[%s2] sm:$0x1]
    %v1352 = vlaneseq
    %v1353 = vshrl.u32 %v1352, 7
    %v1354 = vsub.s32 0, %v1353
    %v1355 = vrot.slane %v1350, %v1354
    %v1357 = vadd.f32 %v1349, %v1355
    %v1358 = vmax.f32 %v1357, 0.0
    %v1359 = vpack.c.bf16 %v1358, %v1358
    %v1360 = vld [vmem:[%s3] sm:$0xf]
    %v1361 = vld [vmem:[%s3 + $0x4] sm:$0xf]
    %v1362 = vld [vmem:[%s3 + $0x8] sm:$0xf]
    %v1363 = vld [vmem:[%s3 + $0xc] sm:$0xf]
    %v1364 = vld [vmem:[%s3 + $0x10] sm:$0xf]
    %v1365 = vld [vmem:[%s3 + $0x14] sm:$0xf]
    %v1366 = vld [vmem:[%s3 + $0x18] sm:$0xf]
    %v1367 = vld [vmem:[%s3 + $0x1c] sm:$0xf]
    %v1368 = vld [vmem:[%s3 + $0x20] sm:$0xf]
    %v1369 = vld [vmem:[%s3 + $0x24] sm:$0xf]
    %v1370 = vld [vmem:[%s3 + $0x28] sm:$0xf]
    %v1371 = vld [vmem:[%s3 + $0x2c] sm:$0xf]
    %v1372 = vld [vmem:[%s3 + $0x30] sm:$0xf]
    %v1373 = vld [vmem:[%s3 + $0x34] sm:$0xf]
    %v1374 = vld [vmem:[%s3 + $0x38] sm:$0xf]
    %v1375 = vld [vmem:[%s3 + $0x3c] sm:$0xf]
    %v1376 = vld [vmem:[%s4] sm:$0x1]
    %v1378 = vlaneseq
    %v1379 = vshrl.u32 %v1378, 7
    %v1380 = vsub.s32 0, %v1379
    %v1381 = vrot.slane %v1376, %v1380
    %v1399 = vunpack.c.l.b16 %v1360
    %v1400 = vunpack.c.l.b16 %v1361
    %v1401 = vunpack.c.l.b16 %v1362
    %v1402 = vunpack.c.l.b16 %v1363
    %v1403 = vunpack.c.l.b16 %v1364
    %v1404 = vunpack.c.l.b16 %v1365
    %v1405 = vunpack.c.l.b16 %v1366
    %v1406 = vunpack.c.l.b16 %v1367
    %v1407 = vunpack.c.l.b16 %v1368
    %v1408 = vunpack.c.l.b16 %v1369
    %v1409 = vunpack.c.l.b16 %v1370
    %v1410 = vunpack.c.l.b16 %v1371
    %v1411 = vunpack.c.l.b16 %v1372
    %v1412 = vunpack.c.l.b16 %v1373
    %v1413 = vunpack.c.l.b16 %v1374
    %v1414 = vunpack.c.l.b16 %v1375
    %v1415 = vpack.c.b16 %v1400, %v1399
    %v1416 = vpack.c.b16 %v1402, %v1401
    %v1417 = vpack.c.b16 %v1404, %v1403
    %v1418 = vpack.c.b16 %v1406, %v1405
    %v1419 = vpack.c.b16 %v1408, %v1407
    %v1420 = vpack.c.b16 %v1410, %v1409
    %v1421 = vpack.c.b16 %v1412, %v1411
    %v1422 = vpack.c.b16 %v1414, %v1413
    %1431 = vmatprep.subr.bf16.mxu0 0
    %1432 = vmatpush1.bf16.msra.mxu0 %v1415
    %1433 = vmatprep.subr.bf16.mxu0 0
    %1434 = vmatpush1.bf16.msra.mxu0 %v1416
    %1435 = vmatprep.subr.bf16.mxu0 0
    %1436 = vmatpush1.bf16.msra.mxu0 %v1417
    %1437 = vmatprep.subr.bf16.mxu0 0
    %1438 = vmatpush1.bf16.msra.mxu0 %v1418
    %1439 = vmatprep.subr.bf16.mxu0 0
    %1440 = vmatpush1.bf16.msra.mxu0 %v1419
    %1441 = vmatprep.subr.bf16.mxu0 0
    %1442 = vmatpush1.bf16.msra.mxu0 %v1420
    %1443 = vmatprep.subr.bf16.mxu0 0
    %1444 = vmatpush1.bf16.msra.mxu0 %v1421
    %1445 = vmatprep.subr.bf16.mxu0 0
    %1446 = vmatpush1.bf16.msra.mxu0 %v1422
    %1447 = vmatprep.subr.bf16.mxu0 0
    %1448 = vmatpush1.bf16.msra.mxu0 0
    %1449 = vmatprep.subr.bf16.mxu0 0
    %1450 = vmatpush1.bf16.msra.mxu0 0
    %1451 = vmatprep.subr.bf16.mxu0 0
    %1452 = vmatpush1.bf16.msra.mxu0 0
    %1453 = vmatprep.subr.bf16.mxu0 0
    %1454 = vmatpush1.bf16.msra.mxu0 0
    %1455 = vmatprep.subr.bf16.mxu0 0
    %1456 = vmatpush1.bf16.msra.mxu0 0
    %1457 = vmatprep.subr.bf16.mxu0 0
    %1458 = vmatpush1.bf16.msra.mxu0 0
    %1459 = vmatprep.subr.bf16.mxu0 0
    %1460 = vmatpush1.bf16.msra.mxu0 0
    %1461 = vmatprep.subr.bf16.mxu0 0
    %1462 = vmatpush1.bf16.msra.mxu0 0
    %1463 = vmatprep.mubr.bf16.mxu0 0
    %1464 = vmatmul.mubr.bf16.gmra.mrb[0].mxu0 %v1359
    %v1465 = vpop.f32.mrb[0].mxu0
    %v1466 = vadd.f32 %v1381, %v1465
    %v1467 = vpop.f32.mrb[0].mxu0
    %v1468 = vpop.f32.mrb[0].mxu0
    %v1469 = vpop.f32.mrb[0].mxu0
    %1470 = vdwg.mxu0
    %v1471 = vmax.f32 %v1466, 0.0
    %v1472 = vpack.c.bf16 %v1471, %v1471
    %v1473 = vld [vmem:[%s5] sm:$0xf]
    %v1474 = vld [vmem:[%s5 + $0x4] sm:$0xf]
    %v1475 = vld [vmem:[%s5 + $0x8] sm:$0xf]
    %v1476 = vld [vmem:[%s5 + $0xc] sm:$0xf]
    %v1477 = vld [vmem:[%s5 + $0x10] sm:$0xf]
    %v1478 = vld [vmem:[%s5 + $0x14] sm:$0xf]
    %v1479 = vld [vmem:[%s5 + $0x18] sm:$0xf]
    %v1480 = vld [vmem:[%s5 + $0x1c] sm:$0xf]
    %v1481 = vld [vmem:[%s5 + $0x20] sm:$0xf]
    %v1482 = vld [vmem:[%s5 + $0x24] sm:$0xf]
    %v1483 = vld [vmem:[%s5 + $0x28] sm:$0xf]
    %v1484 = vld [vmem:[%s5 + $0x2c] sm:$0xf]
    %v1485 = vld [vmem:[%s5 + $0x30] sm:$0xf]
    %v1486 = vld [vmem:[%s5 + $0x34] sm:$0xf]
    %v1487 = vld [vmem:[%s5 + $0x38] sm:$0xf]
    %v1488 = vld [vmem:[%s5 + $0x3c] sm:$0xf]
    %v1489 = vld [vmem:[%s6] sm:$0x1]
    %v1491 = vlaneseq
    %v1492 = vshrl.u32 %v1491, 7
    %v1493 = vsub.s32 0, %v1492
    %v1494 = vrot.slane %v1489, %v1493
    %v1512 = vunpack.c.l.b16 %v1473
    %v1513 = vunpack.c.l.b16 %v1474
    %v1514 = vunpack.c.l.b16 %v1475
    %v1515 = vunpack.c.l.b16 %v1476
    %v1516 = vunpack.c.l.b16 %v1477
    %v1517 = vunpack.c.l.b16 %v1478
    %v1518 = vunpack.c.l.b16 %v1479
    %v1519 = vunpack.c.l.b16 %v1480
    %v1520 = vunpack.c.l.b16 %v1481
    %v1521 = vunpack.c.l.b16 %v1482
    %v1522 = vunpack.c.l.b16 %v1483
    %v1523 = vunpack.c.l.b16 %v1484
    %v1524 = vunpack.c.l.b16 %v1485
    %v1525 = vunpack.c.l.b16 %v1486
    %v1526 = vunpack.c.l.b16 %v1487
    %v1527 = vunpack.c.l.b16 %v1488
    %v1528 = vpack.c.b16 %v1513, %v1512
    %v1529 = vpack.c.b16 %v1515, %v1514
    %v1530 = vpack.c.b16 %v1517, %v1516
    %v1531 = vpack.c.b16 %v1519, %v1518
    %v1532 = vpack.c.b16 %v1521, %v1520
    %v1533 = vpack.c.b16 %v1523, %v1522
    %v1534 = vpack.c.b16 %v1525, %v1524
    %v1535 = vpack.c.b16 %v1527, %v1526
    %1544 = vmatprep.subr.bf16.mxu0 0
    %1545 = vmatpush1.bf16.msra.mxu0 %v1528
    %1546 = vmatprep.subr.bf16.mxu0 0
    %1547 = vmatpush1.bf16.msra.mxu0 %v1529
    %1548 = vmatprep.subr.bf16.mxu0 0
    %1549 = vmatpush1.bf16.msra.mxu0 %v1530
    %1550 = vmatprep.subr.bf16.mxu0 0
    %1551 = vmatpush1.bf16.msra.mxu0 %v1531
    %1552 = vmatprep.subr.bf16.mxu0 0
    %1553 = vmatpush1.bf16.msra.mxu0 %v1532
    %1554 = vmatprep.subr.bf16.mxu0 0
    %1555 = vmatpush1.bf16.msra.mxu0 %v1533
    %1556 = vmatprep.subr.bf16.mxu0 0
    %1557 = vmatpush1.bf16.msra.mxu0 %v1534
    %1558 = vmatprep.subr.bf16.mxu0 0
    %1559 = vmatpush1.bf16.msra.mxu0 %v1535
    %1560 = vmatprep.subr.bf16.mxu0 0
    %1561 = vmatpush1.bf16.msra.mxu0 0
    %1562 = vmatprep.subr.bf16.mxu0 0
    %1563 = vmatpush1.bf16.msra.mxu0 0
    %1564 = vmatprep.subr.bf16.mxu0 0
    %1565 = vmatpush1.bf16.msra.mxu0 0
    %1566 = vmatprep.subr.bf16.mxu0 0
    %1567 = vmatpush1.bf16.msra.mxu0 0
    %1568 = vmatprep.subr.bf16.mxu0 0
    %1569 = vmatpush1.bf16.msra.mxu0 0
    %1570 = vmatprep.subr.bf16.mxu0 0
    %1571 = vmatpush1.bf16.msra.mxu0 0
    %1572 = vmatprep.subr.bf16.mxu0 0
    %1573 = vmatpush1.bf16.msra.mxu0 0
    %1574 = vmatprep.subr.bf16.mxu0 0
    %1575 = vmatpush1.bf16.msra.mxu0 0
    %1576 = vmatprep.mubr.bf16.mxu0 0
    %1577 = vmatmul.mubr.bf16.gmra.mrb[0].mxu0 %v1472
    %v1578 = vpop.f32.mrb[0].mxu0
    %v1579 = vadd.f32 %v1494, %v1578
    %v1580 = vpop.f32.mrb[0].mxu0
    %v1581 = vpop.f32.mrb[0].mxu0
    %v1582 = vpop.f32.mrb[0].mxu0
    %1583 = vdwg.mxu0
    %vm1584 = vcmask 1041408
    %v1585 = vsel %vm1584, %v1579, -inf
    %1586 = vmax.xlane.f32.xlu0 %v1585
    %v1587 = vpop.xlane.xlu0 %1586
    %v1588 = vsub.f32 %v1579, %v1587
    %v1589 = vmul.f32 %v1588, 1.442695
    %v1590 = vpow.pop %v1589
    %v1591 = vsel %vm1584, %v1590, 0.0
    %1592 = vadd.xlane.f32.xlu0 %v1591
    %v1593 = vpop.xlane.xlu0 %1592
    %v1594 = vlog2.pop %v1593
    %v1595 = vmul.f32 %v1594, 0.6931472
    %v1596 = vsub.f32 %v1588, %v1595
    %1597 = vst [vmem:[#allocation2] sm:$0x3] %v1596
    // Predicated region
    $region30: #{flower_cnn_forward.3} parent=1 // pred_check
      _
    $region31: #{flower_cnn_forward.3} parent=1 // pred_check_branch
      %1599 = sbr.rel (0) target = $region33
    $region32: #{flower_cnn_forward.3} parent=1 // pred_region
      %s1601 = ssub.s32 32, 32
      %1602 = vsyncadd [#allocation3], %s1601
      %s1604 = sshll.u32 [#allocation2], 4
      %s1605 = int_to_ptr.vmem [resolvable:$true] %s1604
      %1607 = dma.vmem_to_hbm [thread:$0]  %s1605, 32, %s7, [#allocation3]
    $region33: #{flower_cnn_forward.3} parent=1 // pred_fallthru
      _
    // Predicated region
    $region34: #{flower_cnn_forward.3} parent=1 // pred_check
      _
    $region35: #{flower_cnn_forward.3} parent=1 // pred_check_branch
      %1609 = sbr.rel (0) target = $region37
    $region36: #{flower_cnn_forward.3} parent=1 // pred_region
      %1610 = dma.done [#allocation3], 32
    $region37: #{flower_cnn_forward.3} parent=1 // pred_fallthru
      _
    %1611 = vsyncpa [#allocation3], 1

</llo_original>
